<compile_context>
chip_gen: v7x
topology: tpu7x:2x2x1
jax: 0.10.0
libtpu: 0.0.40
codegen_flags: <defaults>
</compile_context>

<pallas_src>
import functools
import math

import jax
import jax.numpy as jnp
from jax.experimental import pallas as pl
from jax.experimental.pallas import tpu as pltpu


def _round_up(x, m):
    return ((x + m - 1) // m) * m


def _graphs_per_block(num_graphs, s_pad, target_rows=256):
    """Pick Bb so Bb*S rows per block fill the MXU M dim / amortize grid overhead."""
    return max(1, min(num_graphs, max(1, target_rows // max(s_pad, 1))))


# ---------------------------------------------------------------------------
# Kernel 1: multi-head self attention over a block of Bb graphs.  The graphs'
# node features are gathered in-kernel from the sparse [N_pad, Dp] array via
# manual DMA using scalar-prefetched per-graph row starts (nodes of each graph
# are contiguous in batch.x).
# ---------------------------------------------------------------------------
def mha_kernel(starts_ref, x_hbm, kbias_ref, wqkv_ref, bqkv_ref, wo_ref, bo_ref,
               o_ref, xbuf, oslab, copy_sems, *, num_heads, dh_pad, mxu_dtype):
    bb, s, dp = xbuf.shape
    i = pl.program_id(0)

    # In-kernel sparse -> dense gather: one S-row window DMA per graph.
    for g in range(bb):
        start = starts_ref[i * bb + g]
        pltpu.make_async_copy(x_hbm.at[pl.ds(start, s)], xbuf.at[g],
                              copy_sems.at[g]).start()
    for g in range(bb):
        pltpu.make_async_copy(x_hbm.at[pl.ds(0, s)], xbuf.at[g],
                              copy_sems.at[g]).wait()

    # Fused QKV projection over the flattened [Bb*S, Dp] slab (one MXU matmul).
    # The 1/sqrt(dh) softmax scale is already folded into the Q columns.
    x2 = xbuf[...].reshape(bb * s, dp)
    qkv = jnp.dot(x2, wqkv_ref[...], preferred_element_type=jnp.float32) + bqkv_ref[...]

    # Hoist the key-padding-bias broadcast out of the head loop (no re-broadcast).
    kb = jnp.broadcast_to(kbias_ref[...], (bb, s, s))        # 0 valid key, -1e9 padded

    nh = num_heads
    for h in range(nh):                      # static unroll; slices are 128-lane aligned
        q0 = h * dh_pad
        k0 = (nh + h) * dh_pad
        v0 = (2 * nh + h) * dh_pad
        qh = qkv[:, q0:q0 + dh_pad].reshape(bb, s, dh_pad).astype(mxu_dtype)
        kh = qkv[:, k0:k0 + dh_pad].reshape(bb, s, dh_pad).astype(mxu_dtype)
        vh = qkv[:, v0:v0 + dh_pad].reshape(bb, s, dh_pad).astype(mxu_dtype)

        sc = jnp.einsum("bqd,bkd->bqk", qh, kh,
                        preferred_element_type=jnp.float32) + kb          # [Bb,S,S]
        m = jnp.max(sc, axis=-1, keepdims=True)
        p = jnp.exp(sc - m)
        denom = jnp.sum(p, axis=-1, keepdims=True)
        p = p * pl.reciprocal(denom, approx=True)            # EUP slot, off the VALU path

        oh = jnp.einsum("bqk,bkd->bqd", p.astype(mxu_dtype), vh,
                        preferred_element_type=jnp.float32)               # [Bb,S,dh_pad]
        # Stash this head's output at its lane-aligned slab offset; the single big
        # W_O matmul happens once after the loop (no tiny-K matmuls, no concat).
        oslab[:, h * dh_pad:(h + 1) * dh_pad] = (
            oh.reshape(bb * s, dh_pad).astype(oslab.dtype))

    out = jnp.dot(oslab[...], wo_ref[...],
                  preferred_element_type=jnp.float32) + bo_ref[...]
    o_ref[...] = out.reshape(bb, s, dp)


def mha_pallas(x_pad, starts_all, kbias, wqkv, bqkv, wo, bo, *, num_heads,
               graphs_per_block, s_pad, dh_pad, mxu_dtype):
    b_pad = kbias.shape[0]
    dp = x_pad.shape[1]
    bb = graphs_per_block
    kernel = functools.partial(mha_kernel, num_heads=num_heads, dh_pad=dh_pad,
                               mxu_dtype=mxu_dtype)
    return pl.pallas_call(
        kernel,
        out_shape=jax.ShapeDtypeStruct((b_pad, s_pad, dp), jnp.float32),
        grid_spec=pltpu.PrefetchScalarGridSpec(
            num_scalar_prefetch=1,
            grid=(b_pad // bb,),
            in_specs=[
                pl.BlockSpec(memory_space=pl.ANY),                       # sparse x (HBM)
                pl.BlockSpec((bb, 1, s_pad), lambda i, st: (i, 0, 0)),   # key-pad bias
                # constant-index weights/biases (see TODO re pl.Buffered(1) on v7x)
                pl.BlockSpec(wqkv.shape, lambda i, st: (0, 0)),
                pl.BlockSpec(bqkv.shape, lambda i, st: (0, 0)),
                pl.BlockSpec(wo.shape, lambda i, st: (0, 0)),
                pl.BlockSpec(bo.shape, lambda i, st: (0, 0)),
            ],
            out_specs=pl.BlockSpec((bb, s_pad, dp), lambda i, st: (i, 0, 0)),
            scratch_shapes=[
                pltpu.VMEM((bb, s_pad, dp), x_pad.dtype),                # gathered graphs
                pltpu.VMEM((bb * s_pad, num_heads * dh_pad), mxu_dtype), # per-head slab
                pltpu.SemaphoreType.DMA((bb,)),
            ]),
        compiler_params=pltpu.CompilerParams(dimension_semantics=("parallel",)),
    )(starts_all, x_pad, kbias, wqkv, bqkv, wo, bo)


# ---------------------------------------------------------------------------
# Kernel 2a/2b: residual add + BatchNorm1d (training-mode batch statistics),
# two-pass: partial sums over row blocks (split across 2 TCs), then a parallel
# normalize pass.  Everything runs at the lane-dense padded feature dim Dp.
# ---------------------------------------------------------------------------
def bn_stats_kernel(h_in_ref, h_attn_ref, sum_ref, sumsq_ref):
    @pl.when(pl.program_id(1) == 0)
    def _():
        sum_ref[...] = jnp.zeros_like(sum_ref)
        sumsq_ref[...] = jnp.zeros_like(sumsq_ref)

    y = h_in_ref[...] + h_attn_ref[...]
    dp = y.shape[-1]
    sum_ref[...] += jnp.sum(y, axis=0, keepdims=True).reshape(1, 1, dp)
    sumsq_ref[...] += jnp.sum(y * y, axis=0, keepdims=True).reshape(1, 1, dp)


def bn_apply_kernel(h_in_ref, h_attn_ref, sums_ref, sumsqs_ref, gamma_ref,
                    beta_ref, o_ref, *, n, eps):
    total = jnp.sum(sums_ref[...], axis=0)                    # (1, Dp): combine TC partials
    totalsq = jnp.sum(sumsqs_ref[...], axis=0)
    mean = total * (1.0 / n)
    var = totalsq * (1.0 / n) - mean * mean                   # biased var, matches PyTorch BN
    scale = jax.lax.rsqrt(var + eps) * gamma_ref[...]
    y = h_in_ref[...] + h_attn_ref[...]
    o_ref[...] = (y - mean) * scale + beta_ref[...]


def residual_bn_pallas(h_in, h_attn, gamma, beta, *, eps=1e-5,
                       target_block_bytes=2 << 20):
    n, dp = h_in.shape
    # Row blocks sized by bytes (~2 MiB per streamed array block), not a fixed count.
    tm = max(8, min((target_block_bytes // (4 * dp)) // 8 * 8, _round_up(n, 8)))
    blocks = _round_up(pl.cdiv(n, tm), 2)      # even block count -> 2-way TC split
    n_pad = blocks * tm
    if n_pad != n:
        pad = ((0, n_pad - n), (0, 0))         # zero rows contribute 0 to the sums
        h_in = jnp.pad(h_in, pad)
        h_attn = jnp.pad(h_attn, pad)

    inner = blocks // 2
    row_spec = pl.BlockSpec((tm, dp), lambda i: (i, 0))
    split_spec = pl.BlockSpec((tm, dp), lambda c, i: (c * inner + i, 0))
    part_spec = pl.BlockSpec((1, 1, dp), lambda c, i: (c, 0, 0))

    sums, sumsqs = pl.pallas_call(
        bn_stats_kernel,
        out_shape=(jax.ShapeDtypeStruct((2, 1, dp), jnp.float32),
                   jax.ShapeDtypeStruct((2, 1, dp), jnp.float32)),
        grid=(2, inner),
        in_specs=[split_spec, split_spec],
        out_specs=(part_spec, part_spec),
        compiler_params=pltpu.CompilerParams(
            dimension_semantics=("parallel", "arbitrary")),
    )(h_in, h_attn)

    y = pl.pallas_call(
        functools.partial(bn_apply_kernel, n=float(n), eps=eps),
        out_shape=jax.ShapeDtypeStruct((n_pad, dp), jnp.float32),
        grid=(blocks,),
        in_specs=[row_spec, row_spec,
                  pl.BlockSpec((2, 1, dp), lambda i: (0, 0, 0)),
                  pl.BlockSpec((2, 1, dp), lambda i: (0, 0, 0)),
                  pl.BlockSpec((1, dp), lambda i: (0, 0)),
                  pl.BlockSpec((1, dp), lambda i: (0, 0))],
        out_specs=row_spec,
        compiler_params=pltpu.CompilerParams(dimension_semantics=("parallel",)),
    )(h_in, h_attn, sums, sumsqs, gamma, beta)
    return y[:n]


# ---------------------------------------------------------------------------
# Host-side weight preparation: pad D -> Dp (128-lane dense), pad each head to
# dh_pad (lane-aligned head slices), fold the softmax scale into Q, pre-cast to
# the MXU dtype once (outside the kernel).
# Column layout of the fused QKV weight: [Q_0..Q_{H-1} | K_0..K_{H-1} | V_0..V_{H-1}].
# ---------------------------------------------------------------------------
def _build_kernel_weights(params, num_heads, d, dp, dh_pad, mxu_dtype):
    nh = num_heads
    dh = d // nh
    scale = 1.0 / math.sqrt(dh)
    wqkv_t, bqkv = params["wqkv_t"], params["bqkv"]            # [D,3D], [1,3D]  ([Q|K|V])
    wo_t, bo = params["wo_t"], params["bo"]                    # [D,D], [1,D]

    wqkv = jnp.zeros((dp, 3 * nh * dh_pad), jnp.float32)
    bqkv_p = jnp.zeros((1, 3 * nh * dh_pad), jnp.float32)
    wo = jnp.zeros((nh * dh_pad, dp), jnp.float32)
    for i in range(nh):
        for j, fac in ((0, scale), (1, 1.0), (2, 1.0)):        # Q (pre-scaled), K, V
            src = slice(j * d + i * dh, j * d + (i + 1) * dh)
            dst = slice((j * nh + i) * dh_pad, (j * nh + i) * dh_pad + dh)
            wqkv = wqkv.at[:d, dst].set(wqkv_t[:, src] * fac)
            bqkv_p = bqkv_p.at[:, dst].set(bqkv[:, src] * fac)
        wo = wo.at[i * dh_pad:i * dh_pad + dh, :d].set(wo_t[i * dh:(i + 1) * dh, :])
    bo_p = jnp.zeros((1, dp), jnp.float32).at[:, :d].set(bo)
    return (wqkv.astype(mxu_dtype), bqkv_p, wo.astype(mxu_dtype), bo_p)


# ---------------------------------------------------------------------------
# GlobalModel wrapper (Transformer variant, batch_norm=True, dropout=0)
# ---------------------------------------------------------------------------
def global_model_forward(x, batch_vec, params, num_heads, num_graphs, max_nodes,
                         *, mxu_dtype=jnp.float32):
    n, d = x.shape
    b = num_graphs
    s_pad = _round_up(max_nodes, 8)
    dp = _round_up(d, 128)                  # lane-dense feature dim for all kernels
    dh = d // num_heads
    dh_pad = _round_up(dh, 128)             # per-head slices land on 128-lane tiles
    bb = _graphs_per_block(b, s_pad)
    b_pad = _round_up(b, bb)

    # Per-graph row starts / counts (nodes of each graph are contiguous & sorted).
    counts = jnp.bincount(batch_vec, length=b).astype(jnp.int32)
    starts = jnp.concatenate([jnp.zeros((1,), jnp.int32),
                              jnp.cumsum(counts)[:-1].astype(jnp.int32)])
    pos = jnp.arange(n, dtype=jnp.int32) - starts[batch_vec]
    starts_all = jnp.concatenate([starts, jnp.full((b_pad - b,), n, jnp.int32)])
    counts_all = jnp.concatenate([counts, jnp.zeros((b_pad - b,), jnp.int32)])

    # Additive key-padding bias: 0 for valid keys, -1e9 for padded keys.
    kbias = jnp.where(jnp.arange(s_pad)[None, :] < counts_all[:, None],
                      0.0, -1e9).astype(jnp.float32)[:, None, :]          # [B_pad,1,S_pad]

    # Sparse activation padded to [N + S_pad, Dp] so every per-graph window the
    # kernel DMAs is in bounds; cast once (bf16 path streams half the bytes).
    n_rows = _round_up(n + s_pad, 8)
    x_pad = jnp.zeros((n_rows, dp), jnp.float32).at[:n, :d].set(x).astype(mxu_dtype)

    wqkv, bqkv, wo, bo = _build_kernel_weights(params, num_heads, d, dp, dh_pad,
                                               mxu_dtype)

    h_attn_dense = mha_pallas(x_pad, starts_all, kbias, wqkv, bqkv, wo, bo,
                              num_heads=num_heads, graphs_per_block=bb,
                              s_pad=s_pad, dh_pad=dh_pad, mxu_dtype=mxu_dtype)

    # static-shape (jit-compatible) dense -> sparse gather of the valid rows
    h_attn = h_attn_dense[batch_vec, pos]                                  # [N, Dp]

    # dropout_attn: p=0 / eval mode -> identity.  Residual + BatchNorm1d
    # (training-mode batch statistics; running stats are not updated).
    x_bn = jnp.zeros((n, dp), jnp.float32).at[:, :d].set(x)
    gamma = jnp.ones((1, dp), jnp.float32).at[:, :d].set(params["bn_gamma"].reshape(1, d))
    beta = jnp.zeros((1, dp), jnp.float32).at[:, :d].set(params["bn_beta"].reshape(1, d))
    y = residual_bn_pallas(x_bn, h_attn, gamma, beta)
    return y[:, :d]


# ---------------------------------------------------------------------------
# Pure-JAX reference for the correctness check (original, unpadded param layout)
# ---------------------------------------------------------------------------
def reference_forward(x, batch_vec, params, num_heads, num_graphs, max_nodes):
    n, d = x.shape
    b, s = num_graphs, max_nodes
    dh = d // num_heads
    counts = jnp.bincount(batch_vec, length=b)
    starts = jnp.concatenate([jnp.zeros((1,), jnp.int32),
                              jnp.cumsum(counts)[:-1].astype(jnp.int32)])
    pos = jnp.arange(n) - starts[batch_vec]
    h_dense = jnp.zeros((b, s, d), jnp.float32).at[batch_vec, pos].set(x)
    mask = jnp.zeros((b, s), bool).at[batch_vec, pos].set(True)
    kbias = jnp.where(mask, 0.0, -1e9)[:, None, None, :]                   # [B,1,1,S]

    wqkv_t, bqkv = params["wqkv_t"], params["bqkv"]
    q = h_dense @ wqkv_t[:, :d] + bqkv[:, :d]
    k = h_dense @ wqkv_t[:, d:2 * d] + bqkv[:, d:2 * d]
    v = h_dense @ wqkv_t[:, 2 * d:] + bqkv[:, 2 * d:]
    q = q.reshape(b, s, num_heads, dh).transpose(0, 2, 1, 3)
    k = k.reshape(b, s, num_heads, dh).transpose(0, 2, 1, 3)
    v = v.reshape(b, s, num_heads, dh).transpose(0, 2, 1, 3)
    sc = jnp.einsum("bhqd,bhkd->bhqk", q, k) / math.sqrt(dh) + kbias
    p = jax.nn.softmax(sc, axis=-1)
    o = jnp.einsum("bhqk,bhkd->bhqd", p, v).transpose(0, 2, 1, 3).reshape(b, s, d)
    o = o @ params["wo_t"] + params["bo"]
    h_attn = o[batch_vec, pos]

    y = x + h_attn
    mean = y.mean(0, keepdims=True)
    var = ((y - mean) ** 2).mean(0, keepdims=True)
    return (y - mean) * jax.lax.rsqrt(var + 1e-5) * params["bn_gamma"] + params["bn_beta"]


# ---------------------------------------------------------------------------
if __name__ == "__main__":
    # small shapes: dim_h=32, num_heads=4, 2 graphs with 8 and 6 nodes (S=8, N=14)
    dim_h, num_heads = 32, 4
    node_counts = [8, 6]
    B, S = len(node_counts), max(node_counts)
    N = sum(node_counts)

    key = jax.random.PRNGKey(0)
    ks = jax.random.split(key, 6)

    x = jax.random.normal(ks[0], (N, dim_h), jnp.float32)
    batch_vec = jnp.concatenate(
        [jnp.full((c,), i, jnp.int32) for i, c in enumerate(node_counts)])

    # Fused in-projection (stored transposed so x @ W == x @ W_pt.T), out-projection,
    # BatchNorm1d affine (default init).
    params = {
        "wqkv_t": jax.random.normal(ks[1], (dim_h, 3 * dim_h), jnp.float32) * 0.1,
        "bqkv": jax.random.normal(ks[2], (1, 3 * dim_h), jnp.float32) * 0.1,
        "wo_t": jax.random.normal(ks[3], (dim_h, dim_h), jnp.float32) * 0.1,
        "bo": jax.random.normal(ks[4], (1, dim_h), jnp.float32) * 0.1,
        "bn_gamma": jnp.ones((1, dim_h), jnp.float32),
        "bn_beta": jnp.zeros((1, dim_h), jnp.float32),
    }

    ref = reference_forward(x, batch_vec, params, num_heads, B, S)

    # f32 MXU path (tolerance accounts for the approximate EUP reciprocal in softmax).
    out = global_model_forward(x, batch_vec, params, num_heads, B, S,
                               mxu_dtype=jnp.float32)
    out = jax.block_until_ready(out)
    assert out.shape == (N, dim_h)
    assert jnp.allclose(out, ref, rtol=1e-2, atol=1e-2), "f32 kernel mismatch vs reference"

    # bf16 MXU-operand path (weights/activation pre-cast host-side); accumulation
    # and all softmax math stay f32.
    out_bf16 = global_model_forward(x, batch_vec, params, num_heads, B, S,
                                    mxu_dtype=jnp.bfloat16)
    out_bf16 = jax.block_until_ready(out_bf16)
    assert bool(jnp.all(jnp.isfinite(out_bf16)))
    assert jnp.allclose(out_bf16, ref, rtol=0.15, atol=0.15), "bf16 kernel mismatch vs reference"

    print("KERNEL_OK")
</pallas_src>

<mosaic_0001>
module attributes {stable_mosaic.version = 11 : i64} {
  func.func @mha_kernel(%arg0: i32, %arg1: memref<2xi32, #tpu.memory_space<smem>>, %arg2: memref<24x128xf32, #tpu.memory_space<any>>, %arg3: memref<2x1x8xf32, #tpu.memory_space<vmem>>, %arg4: memref<128x1536xf32, #tpu.memory_space<vmem>>, %arg5: memref<1x1536xf32, #tpu.memory_space<vmem>>, %arg6: memref<512x128xf32, #tpu.memory_space<vmem>>, %arg7: memref<1x128xf32, #tpu.memory_space<vmem>>, %arg8: memref<2x8x128xf32, #tpu.memory_space<vmem>>, %arg9: memref<2x8x128xf32, #tpu.memory_space<vmem>>, %arg10: memref<16x512xf32, #tpu.memory_space<vmem>>, %arg11: memref<2x!tpu.dma_semaphore, #tpu.memory_space<semaphore_mem>>) attributes {dimension_semantics = [#tpu.dimension_semantics<parallel>], iteration_bounds = array<i64: 1>, scalar_prefetch = 1 : i64, scratch_operands = 3 : i64, tpu.core_type = #tpu.core_type<tc>, window_params = [{}, {transform_indices = @transform_1, window_bounds = array<i64: 2, 1, 8>}, {pipeline_mode = #tpu.pipeline_mode<synchronous>, transform_indices = @transform_2, window_bounds = array<i64: 128, 1536>}, {pipeline_mode = #tpu.pipeline_mode<synchronous>, transform_indices = @transform_3, window_bounds = array<i64: 1, 1536>}, {pipeline_mode = #tpu.pipeline_mode<synchronous>, transform_indices = @transform_4, window_bounds = array<i64: 512, 128>}, {pipeline_mode = #tpu.pipeline_mode<synchronous>, transform_indices = @transform_5, window_bounds = array<i64: 1, 128>}, {transform_indices = @transform_6, window_bounds = array<i64: 2, 8, 128>}]} {
    %c2_i32 = arith.constant 2 : i32
    %0 = arith.muli %arg0, %c2_i32 : i32
    %c0_i32 = arith.constant 0 : i32
    %1 = arith.addi %0, %c0_i32 : i32
    %2 = arith.index_cast %1 : i32 to index
    %3 = memref.load %arg1[%2] : memref<2xi32, #tpu.memory_space<smem>>
    %c0_i32_0 = arith.constant 0 : i32
    %c0_i32_1 = arith.constant 0 : i32
    %c0_i32_2 = arith.constant 0 : i32
    %4 = tpu.memref_slice %arg2[%3, %c0_i32_2] : memref<24x128xf32, #tpu.memory_space<any>> -> memref<8x128xf32, #tpu.memory_space<any>>
    %c0_i32_3 = arith.constant 0 : i32
    %c0_i32_4 = arith.constant 0 : i32
    %5 = tpu.memref_slice %arg9[%c0_i32_0, %c0_i32_3, %c0_i32_4] : memref<2x8x128xf32, #tpu.memory_space<vmem>> -> memref<1x8x128xf32, #tpu.memory_space<vmem>>
    %6 = tpu.memref_squeeze %5 : memref<1x8x128xf32, #tpu.memory_space<vmem>> -> memref<8x128xf32, #tpu.memory_space<vmem>>
    %7 = tpu.memref_slice %arg11[%c0_i32_1] : memref<2x!tpu.dma_semaphore, #tpu.memory_space<semaphore_mem>> -> memref<1x!tpu.dma_semaphore, #tpu.memory_space<semaphore_mem>>
    %8 = tpu.memref_squeeze %7 : memref<1x!tpu.dma_semaphore, #tpu.memory_space<semaphore_mem>> -> memref<!tpu.dma_semaphore, #tpu.memory_space<semaphore_mem>>
    tpu.enqueue_dma source(%4 : memref<8x128xf32, #tpu.memory_space<any>>) target(%6 : memref<8x128xf32, #tpu.memory_space<vmem>>) target_semaphore(%8 : memref<!tpu.dma_semaphore, #tpu.memory_space<semaphore_mem>>)
    %c2_i32_5 = arith.constant 2 : i32
    %9 = arith.muli %arg0, %c2_i32_5 : i32
    %c1_i32 = arith.constant 1 : i32
    %10 = arith.addi %9, %c1_i32 : i32
    %11 = arith.index_cast %10 : i32 to index
    %12 = memref.load %arg1[%11] : memref<2xi32, #tpu.memory_space<smem>>
    %c1_i32_6 = arith.constant 1 : i32
    %c1_i32_7 = arith.constant 1 : i32
    %c0_i32_8 = arith.constant 0 : i32
    %13 = tpu.memref_slice %arg2[%12, %c0_i32_8] : memref<24x128xf32, #tpu.memory_space<any>> -> memref<8x128xf32, #tpu.memory_space<any>>
    %c0_i32_9 = arith.constant 0 : i32
    %c0_i32_10 = arith.constant 0 : i32
    %14 = tpu.memref_slice %arg9[%c1_i32_6, %c0_i32_9, %c0_i32_10] : memref<2x8x128xf32, #tpu.memory_space<vmem>> -> memref<1x8x128xf32, #tpu.memory_space<vmem>>
    %15 = tpu.memref_squeeze %14 : memref<1x8x128xf32, #tpu.memory_space<vmem>> -> memref<8x128xf32, #tpu.memory_space<vmem>>
    %16 = tpu.memref_slice %arg11[%c1_i32_7] : memref<2x!tpu.dma_semaphore, #tpu.memory_space<semaphore_mem>> -> memref<1x!tpu.dma_semaphore, #tpu.memory_space<semaphore_mem>>
    %17 = tpu.memref_squeeze %16 : memref<1x!tpu.dma_semaphore, #tpu.memory_space<semaphore_mem>> -> memref<!tpu.dma_semaphore, #tpu.memory_space<semaphore_mem>>
    tpu.enqueue_dma source(%13 : memref<8x128xf32, #tpu.memory_space<any>>) target(%15 : memref<8x128xf32, #tpu.memory_space<vmem>>) target_semaphore(%17 : memref<!tpu.dma_semaphore, #tpu.memory_space<semaphore_mem>>)
    %c0_i32_11 = arith.constant 0 : i32
    %c0_i32_12 = arith.constant 0 : i32
    %c0_i32_13 = arith.constant 0 : i32
    %c0_i32_14 = arith.constant 0 : i32
    %18 = tpu.memref_slice %arg2[%c0_i32_13, %c0_i32_14] : memref<24x128xf32, #tpu.memory_space<any>> -> memref<8x128xf32, #tpu.memory_space<any>>
    %c0_i32_15 = arith.constant 0 : i32
    %c0_i32_16 = arith.constant 0 : i32
    %19 = tpu.memref_slice %arg9[%c0_i32_11, %c0_i32_15, %c0_i32_16] : memref<2x8x128xf32, #tpu.memory_space<vmem>> -> memref<1x8x128xf32, #tpu.memory_space<vmem>>
    %20 = tpu.memref_squeeze %19 : memref<1x8x128xf32, #tpu.memory_space<vmem>> -> memref<8x128xf32, #tpu.memory_space<vmem>>
    %21 = tpu.memref_slice %arg11[%c0_i32_12] : memref<2x!tpu.dma_semaphore, #tpu.memory_space<semaphore_mem>> -> memref<1x!tpu.dma_semaphore, #tpu.memory_space<semaphore_mem>>
    %22 = tpu.memref_squeeze %21 : memref<1x!tpu.dma_semaphore, #tpu.memory_space<semaphore_mem>> -> memref<!tpu.dma_semaphore, #tpu.memory_space<semaphore_mem>>
    tpu.wait_dma2 semaphore(%22 : memref<!tpu.dma_semaphore, #tpu.memory_space<semaphore_mem>>) src(%18 : memref<8x128xf32, #tpu.memory_space<any>>) dst(%20 : memref<8x128xf32, #tpu.memory_space<vmem>>)
    %c1_i32_17 = arith.constant 1 : i32
    %c1_i32_18 = arith.constant 1 : i32
    %c0_i32_19 = arith.constant 0 : i32
    %c0_i32_20 = arith.constant 0 : i32
    %23 = tpu.memref_slice %arg2[%c0_i32_19, %c0_i32_20] : memref<24x128xf32, #tpu.memory_space<any>> -> memref<8x128xf32, #tpu.memory_space<any>>
    %c0_i32_21 = arith.constant 0 : i32
    %c0_i32_22 = arith.constant 0 : i32
    %24 = tpu.memref_slice %arg9[%c1_i32_17, %c0_i32_21, %c0_i32_22] : memref<2x8x128xf32, #tpu.memory_space<vmem>> -> memref<1x8x128xf32, #tpu.memory_space<vmem>>
    %25 = tpu.memref_squeeze %24 : memref<1x8x128xf32, #tpu.memory_space<vmem>> -> memref<8x128xf32, #tpu.memory_space<vmem>>
    %26 = tpu.memref_slice %arg11[%c1_i32_18] : memref<2x!tpu.dma_semaphore, #tpu.memory_space<semaphore_mem>> -> memref<1x!tpu.dma_semaphore, #tpu.memory_space<semaphore_mem>>
    %27 = tpu.memref_squeeze %26 : memref<1x!tpu.dma_semaphore, #tpu.memory_space<semaphore_mem>> -> memref<!tpu.dma_semaphore, #tpu.memory_space<semaphore_mem>>
    tpu.wait_dma2 semaphore(%27 : memref<!tpu.dma_semaphore, #tpu.memory_space<semaphore_mem>>) src(%23 : memref<8x128xf32, #tpu.memory_space<any>>) dst(%25 : memref<8x128xf32, #tpu.memory_space<vmem>>)
    %c0 = arith.constant 0 : index
    %c0_23 = arith.constant 0 : index
    %c0_24 = arith.constant 0 : index
    %28 = vector.load %arg9[%c0, %c0_23, %c0_24] : memref<2x8x128xf32, #tpu.memory_space<vmem>>, vector<2x8x128xf32>
    %29 = vector.shape_cast %28 : vector<2x8x128xf32> to vector<16x128xf32>
    %c0_25 = arith.constant 0 : index
    %c0_26 = arith.constant 0 : index
    %30 = vector.load %arg4[%c0_25, %c0_26] : memref<128x1536xf32, #tpu.memory_space<vmem>>, vector<128x1536xf32>
    %cst = arith.constant dense<0.000000e+00> : vector<16x1536xf32>
    %31 = tpu.matmul %29, %30, %cst {dimension_numbers = #tpu.dot_dimension_numbers<[1], [0], [0], [1], [0, 0, 1, 1], [], []>} : vector<16x128xf32>, vector<128x1536xf32>, vector<16x1536xf32> -> vector<16x1536xf32>
    %c0_27 = arith.constant 0 : index
    %c0_28 = arith.constant 0 : index
    %32 = vector.load %arg5[%c0_27, %c0_28] : memref<1x1536xf32, #tpu.memory_space<vmem>>, vector<1x1536xf32>
    %33 = vector.broadcast %32 : vector<1x1536xf32> to vector<16x1536xf32>
    %34 = arith.addf %31, %33 : vector<16x1536xf32>
    %c0_29 = arith.constant 0 : index
    %c0_30 = arith.constant 0 : index
    %c0_31 = arith.constant 0 : index
    %35 = vector.load %arg3[%c0_29, %c0_30, %c0_31] : memref<2x1x8xf32, #tpu.memory_space<vmem>>, vector<2x1x8xf32>
    %36 = vector.shape_cast %35 : vector<2x1x8xf32> to vector<2x1x8xf32>
    %37 = vector.broadcast %36 : vector<2x1x8xf32> to vector<2x8x8xf32>
    %38 = vector.extract_strided_slice %34 {offsets = [0, 0], sizes = [16, 128], strides = [1, 1]} : vector<16x1536xf32> to vector<16x128xf32>
    %39 = vector.shape_cast %38 : vector<16x128xf32> to vector<2x8x128xf32>
    %40 = vector.extract_strided_slice %34 {offsets = [0, 512], sizes = [16, 128], strides = [1, 1]} : vector<16x1536xf32> to vector<16x128xf32>
    %41 = vector.shape_cast %40 : vector<16x128xf32> to vector<2x8x128xf32>
    %42 = vector.extract_strided_slice %34 {offsets = [0, 1024], sizes = [16, 128], strides = [1, 1]} : vector<16x1536xf32> to vector<16x128xf32>
    %43 = vector.shape_cast %42 : vector<16x128xf32> to vector<2x8x128xf32>
    "tpu.trace_start"() <{level = 10 : i32, message = "bqd,bkd->bqk"}> : () -> ()
    %cst_32 = arith.constant dense<0.000000e+00> : vector<2x8x8xf32>
    %44 = tpu.matmul %39, %41, %cst_32 {dimension_numbers = #tpu.dot_dimension_numbers<[2], [2], [1], [1], [0, 0, 0, 1, 1, 1], [0], [0]>} : vector<2x8x128xf32>, vector<2x8x128xf32>, vector<2x8x8xf32> -> vector<2x8x8xf32>
    "tpu.trace_stop"() : () -> ()
    %45 = arith.addf %44, %37 : vector<2x8x8xf32>
    %cst_33 = arith.constant dense<0xFF800000> : vector<2x8xf32>
    %46 = vector.multi_reduction <maximumf>, %45, %cst_33 [2] : vector<2x8x8xf32> to vector<2x8xf32>
    %47 = vector.shape_cast %46 : vector<2x8xf32> to vector<2x8x1xf32>
    %48 = vector.broadcast %47 : vector<2x8x1xf32> to vector<2x8x8xf32>
    %49 = arith.subf %45, %48 : vector<2x8x8xf32>
    %50 = math.exp %49 : vector<2x8x8xf32>
    %cst_34 = arith.constant dense<0.000000e+00> : vector<2x8xf32>
    %51 = vector.multi_reduction <add>, %50, %cst_34 [2] : vector<2x8x8xf32> to vector<2x8xf32>
    %52 = vector.shape_cast %51 : vector<2x8xf32> to vector<2x8x1xf32>
    %53 = tpu.reciprocal %52 {approx = true} : vector<2x8x1xf32> -> vector<2x8x1xf32>
    %54 = vector.broadcast %53 : vector<2x8x1xf32> to vector<2x8x8xf32>
    %55 = arith.mulf %50, %54 : vector<2x8x8xf32>
    "tpu.trace_start"() <{level = 10 : i32, message = "bqk,bkd->bqd"}> : () -> ()
    %cst_35 = arith.constant dense<0.000000e+00> : vector<2x8x128xf32>
    %56 = tpu.matmul %55, %43, %cst_35 {dimension_numbers = #tpu.dot_dimension_numbers<[2], [1], [1], [2], [0, 0, 0, 1, 1, 2], [0], [0]>} : vector<2x8x8xf32>, vector<2x8x128xf32>, vector<2x8x128xf32> -> vector<2x8x128xf32>
    "tpu.trace_stop"() : () -> ()
    %57 = vector.shape_cast %56 : vector<2x8x128xf32> to vector<16x128xf32>
    %c0_36 = arith.constant 0 : index
    %c0_37 = arith.constant 0 : index
    %58 = vector.load %arg10[%c0_36, %c0_37] : memref<16x512xf32, #tpu.memory_space<vmem>>, vector<16x128xf32>
    tpu.vector_store %arg10[%c0_36, %c0_37], %57 {strides = array<i32>} : memref<16x512xf32, #tpu.memory_space<vmem>>, vector<16x128xf32>,
    %59 = vector.extract_strided_slice %34 {offsets = [0, 128], sizes = [16, 128], strides = [1, 1]} : vector<16x1536xf32> to vector<16x128xf32>
    %60 = vector.shape_cast %59 : vector<16x128xf32> to vector<2x8x128xf32>
    %61 = vector.extract_strided_slice %34 {offsets = [0, 640], sizes = [16, 128], strides = [1, 1]} : vector<16x1536xf32> to vector<16x128xf32>
    %62 = vector.shape_cast %61 : vector<16x128xf32> to vector<2x8x128xf32>
    %63 = vector.extract_strided_slice %34 {offsets = [0, 1152], sizes = [16, 128], strides = [1, 1]} : vector<16x1536xf32> to vector<16x128xf32>
    %64 = vector.shape_cast %63 : vector<16x128xf32> to vector<2x8x128xf32>
    "tpu.trace_start"() <{level = 10 : i32, message = "bqd,bkd->bqk"}> : () -> ()
    %cst_38 = arith.constant dense<0.000000e+00> : vector<2x8x8xf32>
    %65 = tpu.matmul %60, %62, %cst_38 {dimension_numbers = #tpu.dot_dimension_numbers<[2], [2], [1], [1], [0, 0, 0, 1, 1, 1], [0], [0]>} : vector<2x8x128xf32>, vector<2x8x128xf32>, vector<2x8x8xf32> -> vector<2x8x8xf32>
    "tpu.trace_stop"() : () -> ()
    %66 = arith.addf %65, %37 : vector<2x8x8xf32>
    %cst_39 = arith.constant dense<0xFF800000> : vector<2x8xf32>
    %67 = vector.multi_reduction <maximumf>, %66, %cst_39 [2] : vector<2x8x8xf32> to vector<2x8xf32>
    %68 = vector.shape_cast %67 : vector<2x8xf32> to vector<2x8x1xf32>
    %69 = vector.broadcast %68 : vector<2x8x1xf32> to vector<2x8x8xf32>
    %70 = arith.subf %66, %69 : vector<2x8x8xf32>
    %71 = math.exp %70 : vector<2x8x8xf32>
    %cst_40 = arith.constant dense<0.000000e+00> : vector<2x8xf32>
    %72 = vector.multi_reduction <add>, %71, %cst_40 [2] : vector<2x8x8xf32> to vector<2x8xf32>
    %73 = vector.shape_cast %72 : vector<2x8xf32> to vector<2x8x1xf32>
    %74 = tpu.reciprocal %73 {approx = true} : vector<2x8x1xf32> -> vector<2x8x1xf32>
    %75 = vector.broadcast %74 : vector<2x8x1xf32> to vector<2x8x8xf32>
    %76 = arith.mulf %71, %75 : vector<2x8x8xf32>
    "tpu.trace_start"() <{level = 10 : i32, message = "bqk,bkd->bqd"}> : () -> ()
    %cst_41 = arith.constant dense<0.000000e+00> : vector<2x8x128xf32>
    %77 = tpu.matmul %76, %64, %cst_41 {dimension_numbers = #tpu.dot_dimension_numbers<[2], [1], [1], [2], [0, 0, 0, 1, 1, 2], [0], [0]>} : vector<2x8x8xf32>, vector<2x8x128xf32>, vector<2x8x128xf32> -> vector<2x8x128xf32>
    "tpu.trace_stop"() : () -> ()
    %78 = vector.shape_cast %77 : vector<2x8x128xf32> to vector<16x128xf32>
    %c0_42 = arith.constant 0 : index
    %c128 = arith.constant 128 : index
    %79 = vector.load %arg10[%c0_42, %c128] : memref<16x512xf32, #tpu.memory_space<vmem>>, vector<16x128xf32>
    tpu.vector_store %arg10[%c0_42, %c128], %78 {strides = array<i32>} : memref<16x512xf32, #tpu.memory_space<vmem>>, vector<16x128xf32>,
    %80 = vector.extract_strided_slice %34 {offsets = [0, 256], sizes = [16, 128], strides = [1, 1]} : vector<16x1536xf32> to vector<16x128xf32>
    %81 = vector.shape_cast %80 : vector<16x128xf32> to vector<2x8x128xf32>
    %82 = vector.extract_strided_slice %34 {offsets = [0, 768], sizes = [16, 128], strides = [1, 1]} : vector<16x1536xf32> to vector<16x128xf32>
    %83 = vector.shape_cast %82 : vector<16x128xf32> to vector<2x8x128xf32>
    %84 = vector.extract_strided_slice %34 {offsets = [0, 1280], sizes = [16, 128], strides = [1, 1]} : vector<16x1536xf32> to vector<16x128xf32>
    %85 = vector.shape_cast %84 : vector<16x128xf32> to vector<2x8x128xf32>
    "tpu.trace_start"() <{level = 10 : i32, message = "bqd,bkd->bqk"}> : () -> ()
    %cst_43 = arith.constant dense<0.000000e+00> : vector<2x8x8xf32>
    %86 = tpu.matmul %81, %83, %cst_43 {dimension_numbers = #tpu.dot_dimension_numbers<[2], [2], [1], [1], [0, 0, 0, 1, 1, 1], [0], [0]>} : vector<2x8x128xf32>, vector<2x8x128xf32>, vector<2x8x8xf32> -> vector<2x8x8xf32>
    "tpu.trace_stop"() : () -> ()
    %87 = arith.addf %86, %37 : vector<2x8x8xf32>
    %cst_44 = arith.constant dense<0xFF800000> : vector<2x8xf32>
    %88 = vector.multi_reduction <maximumf>, %87, %cst_44 [2] : vector<2x8x8xf32> to vector<2x8xf32>
    %89 = vector.shape_cast %88 : vector<2x8xf32> to vector<2x8x1xf32>
    %90 = vector.broadcast %89 : vector<2x8x1xf32> to vector<2x8x8xf32>
    %91 = arith.subf %87, %90 : vector<2x8x8xf32>
    %92 = math.exp %91 : vector<2x8x8xf32>
    %cst_45 = arith.constant dense<0.000000e+00> : vector<2x8xf32>
    %93 = vector.multi_reduction <add>, %92, %cst_45 [2] : vector<2x8x8xf32> to vector<2x8xf32>
    %94 = vector.shape_cast %93 : vector<2x8xf32> to vector<2x8x1xf32>
    %95 = tpu.reciprocal %94 {approx = true} : vector<2x8x1xf32> -> vector<2x8x1xf32>
    %96 = vector.broadcast %95 : vector<2x8x1xf32> to vector<2x8x8xf32>
    %97 = arith.mulf %92, %96 : vector<2x8x8xf32>
    "tpu.trace_start"() <{level = 10 : i32, message = "bqk,bkd->bqd"}> : () -> ()
    %cst_46 = arith.constant dense<0.000000e+00> : vector<2x8x128xf32>
    %98 = tpu.matmul %97, %85, %cst_46 {dimension_numbers = #tpu.dot_dimension_numbers<[2], [1], [1], [2], [0, 0, 0, 1, 1, 2], [0], [0]>} : vector<2x8x8xf32>, vector<2x8x128xf32>, vector<2x8x128xf32> -> vector<2x8x128xf32>
    "tpu.trace_stop"() : () -> ()
    %99 = vector.shape_cast %98 : vector<2x8x128xf32> to vector<16x128xf32>
    %c0_47 = arith.constant 0 : index
    %c256 = arith.constant 256 : index
    %100 = vector.load %arg10[%c0_47, %c256] : memref<16x512xf32, #tpu.memory_space<vmem>>, vector<16x128xf32>
    tpu.vector_store %arg10[%c0_47, %c256], %99 {strides = array<i32>} : memref<16x512xf32, #tpu.memory_space<vmem>>, vector<16x128xf32>,
    %101 = vector.extract_strided_slice %34 {offsets = [0, 384], sizes = [16, 128], strides = [1, 1]} : vector<16x1536xf32> to vector<16x128xf32>
    %102 = vector.shape_cast %101 : vector<16x128xf32> to vector<2x8x128xf32>
    %103 = vector.extract_strided_slice %34 {offsets = [0, 896], sizes = [16, 128], strides = [1, 1]} : vector<16x1536xf32> to vector<16x128xf32>
    %104 = vector.shape_cast %103 : vector<16x128xf32> to vector<2x8x128xf32>
    %105 = vector.extract_strided_slice %34 {offsets = [0, 1408], sizes = [16, 128], strides = [1, 1]} : vector<16x1536xf32> to vector<16x128xf32>
    %106 = vector.shape_cast %105 : vector<16x128xf32> to vector<2x8x128xf32>
    "tpu.trace_start"() <{level = 10 : i32, message = "bqd,bkd->bqk"}> : () -> ()
    %cst_48 = arith.constant dense<0.000000e+00> : vector<2x8x8xf32>
    %107 = tpu.matmul %102, %104, %cst_48 {dimension_numbers = #tpu.dot_dimension_numbers<[2], [2], [1], [1], [0, 0, 0, 1, 1, 1], [0], [0]>} : vector<2x8x128xf32>, vector<2x8x128xf32>, vector<2x8x8xf32> -> vector<2x8x8xf32>
    "tpu.trace_stop"() : () -> ()
    %108 = arith.addf %107, %37 : vector<2x8x8xf32>
    %cst_49 = arith.constant dense<0xFF800000> : vector<2x8xf32>
    %109 = vector.multi_reduction <maximumf>, %108, %cst_49 [2] : vector<2x8x8xf32> to vector<2x8xf32>
    %110 = vector.shape_cast %109 : vector<2x8xf32> to vector<2x8x1xf32>
    %111 = vector.broadcast %110 : vector<2x8x1xf32> to vector<2x8x8xf32>
    %112 = arith.subf %108, %111 : vector<2x8x8xf32>
    %113 = math.exp %112 : vector<2x8x8xf32>
    %cst_50 = arith.constant dense<0.000000e+00> : vector<2x8xf32>
    %114 = vector.multi_reduction <add>, %113, %cst_50 [2] : vector<2x8x8xf32> to vector<2x8xf32>
    %115 = vector.shape_cast %114 : vector<2x8xf32> to vector<2x8x1xf32>
    %116 = tpu.reciprocal %115 {approx = true} : vector<2x8x1xf32> -> vector<2x8x1xf32>
    %117 = vector.broadcast %116 : vector<2x8x1xf32> to vector<2x8x8xf32>
    %118 = arith.mulf %113, %117 : vector<2x8x8xf32>
    "tpu.trace_start"() <{level = 10 : i32, message = "bqk,bkd->bqd"}> : () -> ()
    %cst_51 = arith.constant dense<0.000000e+00> : vector<2x8x128xf32>
    %119 = tpu.matmul %118, %106, %cst_51 {dimension_numbers = #tpu.dot_dimension_numbers<[2], [1], [1], [2], [0, 0, 0, 1, 1, 2], [0], [0]>} : vector<2x8x8xf32>, vector<2x8x128xf32>, vector<2x8x128xf32> -> vector<2x8x128xf32>
    "tpu.trace_stop"() : () -> ()
    %120 = vector.shape_cast %119 : vector<2x8x128xf32> to vector<16x128xf32>
    %c0_52 = arith.constant 0 : index
    %c384 = arith.constant 384 : index
    %121 = vector.load %arg10[%c0_52, %c384] : memref<16x512xf32, #tpu.memory_space<vmem>>, vector<16x128xf32>
    tpu.vector_store %arg10[%c0_52, %c384], %120 {strides = array<i32>} : memref<16x512xf32, #tpu.memory_space<vmem>>, vector<16x128xf32>,
    %c0_53 = arith.constant 0 : index
    %c0_54 = arith.constant 0 : index
    %122 = vector.load %arg10[%c0_53, %c0_54] : memref<16x512xf32, #tpu.memory_space<vmem>>, vector<16x512xf32>
    %c0_55 = arith.constant 0 : index
    %c0_56 = arith.constant 0 : index
    %123 = vector.load %arg6[%c0_55, %c0_56] : memref<512x128xf32, #tpu.memory_space<vmem>>, vector<512x128xf32>
    %cst_57 = arith.constant dense<0.000000e+00> : vector<16x128xf32>
    %124 = tpu.matmul %122, %123, %cst_57 {dimension_numbers = #tpu.dot_dimension_numbers<[1], [0], [0], [1], [0, 0, 1, 1], [], []>} : vector<16x512xf32>, vector<512x128xf32>, vector<16x128xf32> -> vector<16x128xf32>
    %c0_58 = arith.constant 0 : index
    %c0_59 = arith.constant 0 : index
    %125 = vector.load %arg7[%c0_58, %c0_59] : memref<1x128xf32, #tpu.memory_space<vmem>>, vector<1x128xf32>
    %126 = vector.broadcast %125 : vector<1x128xf32> to vector<16x128xf32>
    %127 = arith.addf %124, %126 : vector<16x128xf32>
    %128 = vector.shape_cast %127 : vector<16x128xf32> to vector<2x8x128xf32>
    %c0_60 = arith.constant 0 : index
    %c0_61 = arith.constant 0 : index
    %c0_62 = arith.constant 0 : index
    %129 = vector.load %arg8[%c0_60, %c0_61, %c0_62] : memref<2x8x128xf32, #tpu.memory_space<vmem>>, vector<2x8x128xf32>
    tpu.vector_store %arg8[%c0_60, %c0_61, %c0_62], %128 {strides = array<i32>} : memref<2x8x128xf32, #tpu.memory_space<vmem>>, vector<2x8x128xf32>,
    return
  }
  func.func @transform_1(%arg0: i32, %arg1: memref<2xi32, #tpu.memory_space<smem>>) -> (i32, i32, i32) {
    %c0_i32 = arith.constant 0 : i32
    %c0_i32_0 = arith.constant 0 : i32
    %c0_i32_1 = arith.constant 0 : i32
    return %arg0, %c0_i32, %c0_i32_0 : i32, i32, i32
  }
  func.func @transform_2(%arg0: i32, %arg1: memref<2xi32, #tpu.memory_space<smem>>) -> (i32, i32) {
    %c0_i32 = arith.constant 0 : i32
    %c0_i32_0 = arith.constant 0 : i32
    %c0_i32_1 = arith.constant 0 : i32
    return %c0_i32, %c0_i32_0 : i32, i32
  }
  func.func @transform_3(%arg0: i32, %arg1: memref<2xi32, #tpu.memory_space<smem>>) -> (i32, i32) {
    %c0_i32 = arith.constant 0 : i32
    %c0_i32_0 = arith.constant 0 : i32
    %c0_i32_1 = arith.constant 0 : i32
    return %c0_i32, %c0_i32_0 : i32, i32
  }
  func.func @transform_4(%arg0: i32, %arg1: memref<2xi32, #tpu.memory_space<smem>>) -> (i32, i32) {
    %c0_i32 = arith.constant 0 : i32
    %c0_i32_0 = arith.constant 0 : i32
    %c0_i32_1 = arith.constant 0 : i32
    return %c0_i32, %c0_i32_0 : i32, i32
  }
  func.func @transform_5(%arg0: i32, %arg1: memref<2xi32, #tpu.memory_space<smem>>) -> (i32, i32) {
    %c0_i32 = arith.constant 0 : i32
    %c0_i32_0 = arith.constant 0 : i32
    %c0_i32_1 = arith.constant 0 : i32
    return %c0_i32, %c0_i32_0 : i32, i32
  }
  func.func @transform_6(%arg0: i32, %arg1: memref<2xi32, #tpu.memory_space<smem>>) -> (i32, i32, i32) {
    %c0_i32 = arith.constant 0 : i32
    %c0_i32_0 = arith.constant 0 : i32
    %c0_i32_1 = arith.constant 0 : i32
    return %arg0, %c0_i32, %c0_i32_0 : i32, i32, i32
  }
}

</mosaic_0001>

<llo_original>
// kernel: tpu_custom_call.1
$region0: #{tpu_custom_call.1}
  #allocation0 [shape = 'u32[]', space=smem, size = 0x4, offset = 0x4, fixed_abs, tag = 'smem constant byte address 0x4 - core index']
  #allocation1 [shape = 'u32[144,128]{1,0:T(1,128)}', space=vmem, size = 0x12000, scoped, tag = 'internal scratch']
  #allocation2 [shape = 'f32[2,8,128]{2,1,0:T(8,128)}', space=vmem, size = 0x2000, scoped, tag = 'scratch operand']
  #allocation3 [shape = 'f32[16,512]{1,0:T(8,128)}', space=vmem, size = 0x8000, scoped, tag = 'scratch operand']
  #allocation4 [shape = 's32[2]{0}', space=sflag, size = 0x8, scoped, tag = 'scratch operand']
  #allocation5 [shape = 's32[1]{0}', space=sflag, size = 0x4, scoped, tag = 'scoped memory for tpu_custom_call.1']
  #allocation6 [shape = 'u8[512]{0}', space=smem, size = 0x200, scoped, tag = 'prefetched SMEM operand 0']
  #allocation13 [shape = 's32[]', space=sflag, size = 0x4, offset = 0, fixed_abs, tag = 'sflag constant byte address 0x0 - dummy sync flag']
  #allocation14 [shape = 's32[]', space=sflag, size = 0x4, offset = 0, fixed_abs, tag = 'sflag constant byte address 0x0 - dummy sync flag']
  #allocation15 [shape = 'u32[]', space=smem, size = 0x4, offset = 0x44, fixed_abs, tag = 'smem constant byte address 0x44 - assertion arg 0']
  #allocation16 [shape = 'u32[]', space=smem, size = 0x4, offset = 0x48, fixed_abs, tag = 'smem constant byte address 0x48 - assertion arg 1']
  #allocation17 [shape = 's32[]', space=sflag, size = 0x4, offset = 0, fixed_abs, tag = 'sflag constant byte address 0x0 - dummy sync flag']
  #allocation18 [shape = 's32[]', space=sflag, size = 0x4, offset = 0, fixed_abs, tag = 'sflag constant byte address 0x0 - dummy sync flag']
  %s0 = inlined_call_operand.hbm [shape: s32[2], index: 0, kind: input, shape index: {}]
  %s1 = inlined_call_operand.hbm [shape: f32[24,128], index: 1, kind: input, shape index: {}]
  %s2 = inlined_call_operand.vmem [shape: f32[2,1,8], index: 2, kind: input, shape index: {}]
  %s3 = inlined_call_operand.hbm [shape: f32[128,1536], index: 3, kind: input, shape index: {}]
  %s4 = inlined_call_operand.vmem [shape: f32[1,1536], index: 4, kind: input, shape index: {}]
  %s5 = inlined_call_operand.hbm [shape: f32[512,128], index: 5, kind: input, shape index: {}]
  %s6 = inlined_call_operand.vmem [shape: f32[1,128], index: 6, kind: input, shape index: {}]
  %s7 = inlined_call_operand.hbm [shape: f32[2,8,128], index: 7, kind: output, shape index: {}]
  %s8 = sld [smem:[#allocation0]]
  $region46: #{tpu_custom_call.1} parent=0
    _
  %s10 = ssub.s32 1, %s8
  %s11 = scalar_select 0, %s10, %s8
  %13 = dma.hbm_to_smem %s0, 16, [#allocation6], [#allocation5]
  %14 = dma.done [#allocation5], 16
  %15 = sfence
  $region1: #{tpu_custom_call.1} parent=0
    #allocation7 [shape = 'u8[786432]{0}', space=vmem, size = 0xc0000, scoped, tag = 'input window, operand 3, single buffered']
    #allocation8 [shape = 's32[1]{0}', space=sflag, size = 0x4, scoped, tag = 'scoped memory for tpu_custom_call.1']
    #allocation9 [shape = 's32[1]{0}', space=sflag, size = 0x4, scoped, tag = 'scoped memory for tpu_custom_call.1']
    #allocation10 [shape = 'u8[262144]{0}', space=vmem, size = 0x40000, scoped, tag = 'input window, operand 5, single buffered']
    #allocation11 [shape = 's32[1]{0}', space=sflag, size = 0x4, scoped, tag = 'scoped memory for tpu_custom_call.1']
    #allocation12 [shape = 'u8[8192]{0}', space=vmem, size = 0x2000, scoped, tag = 'output window, operand 0, single buffered']
    %16 = vsyncpa [#allocation8], 0
    %17 = vsyncpa [#allocation11], 0
    %18 = vsyncpa [#allocation9], 0
    // Predicated region
    $region2: #{tpu_custom_call.1} parent=1 // pred_check
      _
    $region3: #{tpu_custom_call.1} parent=1 // pred_check_branch
      %20 = sbr.rel (0) target = $region5
    $region4: #{tpu_custom_call.1} parent=1 // pred_region
      _
    $region5: #{tpu_custom_call.1} parent=1 // pred_fallthru
      _
    // Predicated region
    $region6: #{tpu_custom_call.1} parent=1 // pred_check
      _
    $region7: #{tpu_custom_call.1} parent=1 // pred_check_branch
      %22 = sbr.rel (0) target = $region9
    $region8: #{tpu_custom_call.1} parent=1 // pred_region
      %s24 = ssub.s32 24576, 24576
      %25 = vsyncadd [#allocation8], %s24
      %s26 = sshll.u32 [#allocation7], 4
      %s27 = int_to_ptr.vmem [resolvable:$true] %s26
      %32 = dma.hbm_to_vmem [thread:$0]  %s3, 24576, %s27, [#allocation8], 1536, 1536, 96
    $region9: #{tpu_custom_call.1} parent=1 // pred_fallthru
      _
    // Predicated region
    $region10: #{tpu_custom_call.1} parent=1 // pred_check
      _
    $region11: #{tpu_custom_call.1} parent=1 // pred_check_branch
      %34 = sbr.rel (0) target = $region13
    $region12: #{tpu_custom_call.1} parent=1 // pred_region
      _
    $region13: #{tpu_custom_call.1} parent=1 // pred_fallthru
      _
    // Predicated region
    $region14: #{tpu_custom_call.1} parent=1 // pred_check
      _
    $region15: #{tpu_custom_call.1} parent=1 // pred_check_branch
      %36 = sbr.rel (0) target = $region17
    $region16: #{tpu_custom_call.1} parent=1 // pred_region
      %s38 = ssub.s32 8192, 8192
      %39 = vsyncadd [#allocation11], %s38
      %s40 = sshll.u32 [#allocation10], 4
      %s41 = int_to_ptr.vmem [resolvable:$true] %s40
      %46 = dma.hbm_to_vmem [thread:$0]  %s5, 8192, %s41, [#allocation11], 128, 128, 8
    $region17: #{tpu_custom_call.1} parent=1 // pred_fallthru
      _
    // Predicated region
    $region18: #{tpu_custom_call.1} parent=1 // pred_check
      _
    $region19: #{tpu_custom_call.1} parent=1 // pred_check_branch
      %48 = sbr.rel (0) target = $region21
    $region20: #{tpu_custom_call.1} parent=1 // pred_region
      _
    $region21: #{tpu_custom_call.1} parent=1 // pred_fallthru
      _
    // Predicated region
    $region22: #{tpu_custom_call.1} parent=1 // pred_check
      _
    $region23: #{tpu_custom_call.1} parent=1 // pred_check_branch
      %50 = sbr.rel (0) target = $region25
    $region24: #{tpu_custom_call.1} parent=1 // pred_region
      %51 = dma.done [#allocation8], 24576
    $region25: #{tpu_custom_call.1} parent=1 // pred_fallthru
      _
    // Predicated region
    $region26: #{tpu_custom_call.1} parent=1 // pred_check
      _
    $region27: #{tpu_custom_call.1} parent=1 // pred_check_branch
      %53 = sbr.rel (0) target = $region29
    $region28: #{tpu_custom_call.1} parent=1 // pred_region
      %54 = dma.done [#allocation11], 8192
    $region29: #{tpu_custom_call.1} parent=1 // pred_fallthru
      _
    %s55 = smul.u32 0, 2
    %s56 = sld [smem:[#allocation6 + %s55]]
    %s57 = smul.addr %s56, 16
    %s58 = scalar_lea.hbm %s1, %s57
    // Predicated region
    $region30: #{tpu_custom_call.1} parent=1 // pred_check
      _
    $region31: #{tpu_custom_call.1} parent=1 // pred_check_branch
      %60 = sbr.rel target = $region33
    $region32: #{tpu_custom_call.1} parent=1 // pred_region
      %61 = sst [smem:[#allocation15]] [#allocation14]
      %62 = sst [smem:[#allocation16]] [#allocation13]
    $region33: #{tpu_custom_call.1} parent=1 // pred_fallthru
      _
    %64 = shalt.err (0)
    %s66 = sshll.u32 [#allocation2], 4
    %s67 = int_to_ptr.vmem [resolvable:$true] %s66
    %69 = dma.hbm_to_vmem [thread:$0]  %s58, 128, %s67, [#allocation4]
    %s70 = sadd.s32 %s55, 1
    %s71 = sld [smem:[#allocation6 + %s70]]
    %s72 = smul.addr %s71, 16
    %s73 = scalar_lea.hbm %s1, %s72
    %s74 = scalar_lea.vmem [#allocation2], 8
    %s75 = scalar_lea.sflag [#allocation4], 1
    // Predicated region
    $region34: #{tpu_custom_call.1} parent=1 // pred_check
      _
    $region35: #{tpu_custom_call.1} parent=1 // pred_check_branch
      %77 = sbr.rel target = $region37
    $region36: #{tpu_custom_call.1} parent=1 // pred_region
      %78 = sst [smem:[#allocation15]] [#allocation18]
      %79 = sst [smem:[#allocation16]] [#allocation17]
    $region37: #{tpu_custom_call.1} parent=1 // pred_fallthru
      _
    %81 = shalt.err (0)
    %s83 = sshll.u32 %s74, 4
    %s84 = int_to_ptr.vmem [resolvable:$true] %s83
    %86 = dma.hbm_to_vmem [thread:$0]  %s73, 128, %s84, %s75
    %s87 = smul.u32 8, 1
    %s88 = sshll.u32 %s87, 4
    %89 = dma.done [#allocation4], %s88
    %s90 = sshll.u32 %s87, 4
    %91 = dma.done %s75, %s90
    %v92 = vld [vmem:[#allocation2] sm:$0xff]
    %v93 = vld [vmem:[#allocation2 + $0x8] sm:$0xff]
    %v94 = vld [vmem:[#allocation7] sm:$0xff]
    %v95 = vld [vmem:[#allocation7 + $0x8] sm:$0xff]
    %v96 = vld [vmem:[#allocation7 + $0x10] sm:$0xff]
    %v97 = vld [vmem:[#allocation7 + $0x18] sm:$0xff]
    %v98 = vld [vmem:[#allocation7 + $0x20] sm:$0xff]
    %v99 = vld [vmem:[#allocation7 + $0x28] sm:$0xff]
    %v100 = vld [vmem:[#allocation7 + $0x30] sm:$0xff]
    %v101 = vld [vmem:[#allocation7 + $0x38] sm:$0xff]
    %v102 = vld [vmem:[#allocation7 + $0x40] sm:$0xff]
    %v103 = vld [vmem:[#allocation7 + $0x48] sm:$0xff]
    %v104 = vld [vmem:[#allocation7 + $0x50] sm:$0xff]
    %v105 = vld [vmem:[#allocation7 + $0x58] sm:$0xff]
    %v106 = vld [vmem:[#allocation7 + $0x60] sm:$0xff]
    %v107 = vld [vmem:[#allocation7 + $0x68] sm:$0xff]
    %v108 = vld [vmem:[#allocation7 + $0x70] sm:$0xff]
    %v109 = vld [vmem:[#allocation7 + $0x78] sm:$0xff]
    %v110 = vld [vmem:[#allocation7 + $0x80] sm:$0xff]
    %v111 = vld [vmem:[#allocation7 + $0x88] sm:$0xff]
    %v112 = vld [vmem:[#allocation7 + $0x90] sm:$0xff]
    %v113 = vld [vmem:[#allocation7 + $0x98] sm:$0xff]
    %v114 = vld [vmem:[#allocation7 + $0xa0] sm:$0xff]
    %v115 = vld [vmem:[#allocation7 + $0xa8] sm:$0xff]
    %v116 = vld [vmem:[#allocation7 + $0xb0] sm:$0xff]
    %v117 = vld [vmem:[#allocation7 + $0xb8] sm:$0xff]
    %v118 = vld [vmem:[#allocation7 + $0xc0] sm:$0xff]
    %v119 = vld [vmem:[#allocation7 + $0xc8] sm:$0xff]
    %v120 = vld [vmem:[#allocation7 + $0xd0] sm:$0xff]
    %v121 = vld [vmem:[#allocation7 + $0xd8] sm:$0xff]
    %v122 = vld [vmem:[#allocation7 + $0xe0] sm:$0xff]
    %v123 = vld [vmem:[#allocation7 + $0xe8] sm:$0xff]
    %v124 = vld [vmem:[#allocation7 + $0xf0] sm:$0xff]
    %v125 = vld [vmem:[#allocation7 + $0xf8] sm:$0xff]
    %v126 = vld [vmem:[#allocation7 + $0x100] sm:$0xff]
    %v127 = vld [vmem:[#allocation7 + $0x108] sm:$0xff]
    %v128 = vld [vmem:[#allocation7 + $0x110] sm:$0xff]
    %v129 = vld [vmem:[#allocation7 + $0x118] sm:$0xff]
    %v130 = vld [vmem:[#allocation7 + $0x120] sm:$0xff]
    %v131 = vld [vmem:[#allocation7 + $0x128] sm:$0xff]
    %v132 = vld [vmem:[#allocation7 + $0x130] sm:$0xff]
    %v133 = vld [vmem:[#allocation7 + $0x138] sm:$0xff]
    %v134 = vld [vmem:[#allocation7 + $0x140] sm:$0xff]
    %v135 = vld [vmem:[#allocation7 + $0x148] sm:$0xff]
    %v136 = vld [vmem:[#allocation7 + $0x150] sm:$0xff]
    %v137 = vld [vmem:[#allocation7 + $0x158] sm:$0xff]
    %v138 = vld [vmem:[#allocation7 + $0x160] sm:$0xff]
    %v139 = vld [vmem:[#allocation7 + $0x168] sm:$0xff]
    %v140 = vld [vmem:[#allocation7 + $0x170] sm:$0xff]
    %v141 = vld [vmem:[#allocation7 + $0x178] sm:$0xff]
    %v142 = vld [vmem:[#allocation7 + $0x180] sm:$0xff]
    %v143 = vld [vmem:[#allocation7 + $0x188] sm:$0xff]
    %v144 = vld [vmem:[#allocation7 + $0x190] sm:$0xff]
    %v145 = vld [vmem:[#allocation7 + $0x198] sm:$0xff]
    %v146 = vld [vmem:[#allocation7 + $0x1a0] sm:$0xff]
    %v147 = vld [vmem:[#allocation7 + $0x1a8] sm:$0xff]
    %v148 = vld [vmem:[#allocation7 + $0x1b0] sm:$0xff]
    %v149 = vld [vmem:[#allocation7 + $0x1b8] sm:$0xff]
    %v150 = vld [vmem:[#allocation7 + $0x1c0] sm:$0xff]
    %v151 = vld [vmem:[#allocation7 + $0x1c8] sm:$0xff]
    %v152 = vld [vmem:[#allocation7 + $0x1d0] sm:$0xff]
    %v153 = vld [vmem:[#allocation7 + $0x1d8] sm:$0xff]
    %v154 = vld [vmem:[#allocation7 + $0x1e0] sm:$0xff]
    %v155 = vld [vmem:[#allocation7 + $0x1e8] sm:$0xff]
    %v156 = vld [vmem:[#allocation7 + $0x1f0] sm:$0xff]
    %v157 = vld [vmem:[#allocation7 + $0x1f8] sm:$0xff]
    %v158 = vld [vmem:[#allocation7 + $0x200] sm:$0xff]
    %v159 = vld [vmem:[#allocation7 + $0x208] sm:$0xff]
    %v160 = vld [vmem:[#allocation7 + $0x210] sm:$0xff]
    %v161 = vld [vmem:[#allocation7 + $0x218] sm:$0xff]
    %v162 = vld [vmem:[#allocation7 + $0x220] sm:$0xff]
    %v163 = vld [vmem:[#allocation7 + $0x228] sm:$0xff]
    %v164 = vld [vmem:[#allocation7 + $0x230] sm:$0xff]
    %v165 = vld [vmem:[#allocation7 + $0x238] sm:$0xff]
    %v166 = vld [vmem:[#allocation7 + $0x240] sm:$0xff]
    %v167 = vld [vmem:[#allocation7 + $0x248] sm:$0xff]
    %v168 = vld [vmem:[#allocation7 + $0x250] sm:$0xff]
    %v169 = vld [vmem:[#allocation7 + $0x258] sm:$0xff]
    %v170 = vld [vmem:[#allocation7 + $0x260] sm:$0xff]
    %v171 = vld [vmem:[#allocation7 + $0x268] sm:$0xff]
    %v172 = vld [vmem:[#allocation7 + $0x270] sm:$0xff]
    %v173 = vld [vmem:[#allocation7 + $0x278] sm:$0xff]
    %v174 = vld [vmem:[#allocation7 + $0x280] sm:$0xff]
    %v175 = vld [vmem:[#allocation7 + $0x288] sm:$0xff]
    %v176 = vld [vmem:[#allocation7 + $0x290] sm:$0xff]
    %v177 = vld [vmem:[#allocation7 + $0x298] sm:$0xff]
    %v178 = vld [vmem:[#allocation7 + $0x2a0] sm:$0xff]
    %v179 = vld [vmem:[#allocation7 + $0x2a8] sm:$0xff]
    %v180 = vld [vmem:[#allocation7 + $0x2b0] sm:$0xff]
    %v181 = vld [vmem:[#allocation7 + $0x2b8] sm:$0xff]
    %v182 = vld [vmem:[#allocation7 + $0x2c0] sm:$0xff]
    %v183 = vld [vmem:[#allocation7 + $0x2c8] sm:$0xff]
    %v184 = vld [vmem:[#allocation7 + $0x2d0] sm:$0xff]
    %v185 = vld [vmem:[#allocation7 + $0x2d8] sm:$0xff]
    %v186 = vld [vmem:[#allocation7 + $0x2e0] sm:$0xff]
    %v187 = vld [vmem:[#allocation7 + $0x2e8] sm:$0xff]
    %v188 = vld [vmem:[#allocation7 + $0x2f0] sm:$0xff]
    %v189 = vld [vmem:[#allocation7 + $0x2f8] sm:$0xff]
    %v190 = vld [vmem:[#allocation7 + $0x300] sm:$0xff]
    %v191 = vld [vmem:[#allocation7 + $0x308] sm:$0xff]
    %v192 = vld [vmem:[#allocation7 + $0x310] sm:$0xff]
    %v193 = vld [vmem:[#allocation7 + $0x318] sm:$0xff]
    %v194 = vld [vmem:[#allocation7 + $0x320] sm:$0xff]
    %v195 = vld [vmem:[#allocation7 + $0x328] sm:$0xff]
    %v196 = vld [vmem:[#allocation7 + $0x330] sm:$0xff]
    %v197 = vld [vmem:[#allocation7 + $0x338] sm:$0xff]
    %v198 = vld [vmem:[#allocation7 + $0x340] sm:$0xff]
    %v199 = vld [vmem:[#allocation7 + $0x348] sm:$0xff]
    %v200 = vld [vmem:[#allocation7 + $0x350] sm:$0xff]
    %v201 = vld [vmem:[#allocation7 + $0x358] sm:$0xff]
    %v202 = vld [vmem:[#allocation7 + $0x360] sm:$0xff]
    %v203 = vld [vmem:[#allocation7 + $0x368] sm:$0xff]
    %v204 = vld [vmem:[#allocation7 + $0x370] sm:$0xff]
    %v205 = vld [vmem:[#allocation7 + $0x378] sm:$0xff]
    %v206 = vld [vmem:[#allocation7 + $0x380] sm:$0xff]
    %v207 = vld [vmem:[#allocation7 + $0x388] sm:$0xff]
    %v208 = vld [vmem:[#allocation7 + $0x390] sm:$0xff]
    %v209 = vld [vmem:[#allocation7 + $0x398] sm:$0xff]
    %v210 = vld [vmem:[#allocation7 + $0x3a0] sm:$0xff]
    %v211 = vld [vmem:[#allocation7 + $0x3a8] sm:$0xff]
    %v212 = vld [vmem:[#allocation7 + $0x3b0] sm:$0xff]
    %v213 = vld [vmem:[#allocation7 + $0x3b8] sm:$0xff]
    %v214 = vld [vmem:[#allocation7 + $0x3c0] sm:$0xff]
    %v215 = vld [vmem:[#allocation7 + $0x3c8] sm:$0xff]
    %v216 = vld [vmem:[#allocation7 + $0x3d0] sm:$0xff]
    %v217 = vld [vmem:[#allocation7 + $0x3d8] sm:$0xff]
    %v218 = vld [vmem:[#allocation7 + $0x3e0] sm:$0xff]
    %v219 = vld [vmem:[#allocation7 + $0x3e8] sm:$0xff]
    %v220 = vld [vmem:[#allocation7 + $0x3f0] sm:$0xff]
    %v221 = vld [vmem:[#allocation7 + $0x3f8] sm:$0xff]
    %v222 = vld [vmem:[#allocation7 + $0x400] sm:$0xff]
    %v223 = vld [vmem:[#allocation7 + $0x408] sm:$0xff]
    %v224 = vld [vmem:[#allocation7 + $0x410] sm:$0xff]
    %v225 = vld [vmem:[#allocation7 + $0x418] sm:$0xff]
    %v226 = vld [vmem:[#allocation7 + $0x420] sm:$0xff]
    %v227 = vld [vmem:[#allocation7 + $0x428] sm:$0xff]
    %v228 = vld [vmem:[#allocation7 + $0x430] sm:$0xff]
    %v229 = vld [vmem:[#allocation7 + $0x438] sm:$0xff]
    %v230 = vld [vmem:[#allocation7 + $0x440] sm:$0xff]
    %v231 = vld [vmem:[#allocation7 + $0x448] sm:$0xff]
    %v232 = vld [vmem:[#allocation7 + $0x450] sm:$0xff]
    %v233 = vld [vmem:[#allocation7 + $0x458] sm:$0xff]
    %v234 = vld [vmem:[#allocation7 + $0x460] sm:$0xff]
    %v235 = vld [vmem:[#allocation7 + $0x468] sm:$0xff]
    %v236 = vld [vmem:[#allocation7 + $0x470] sm:$0xff]
    %v237 = vld [vmem:[#allocation7 + $0x478] sm:$0xff]
    %v238 = vld [vmem:[#allocation7 + $0x480] sm:$0xff]
    %v239 = vld [vmem:[#allocation7 + $0x488] sm:$0xff]
    %v240 = vld [vmem:[#allocation7 + $0x490] sm:$0xff]
    %v241 = vld [vmem:[#allocation7 + $0x498] sm:$0xff]
    %v242 = vld [vmem:[#allocation7 + $0x4a0] sm:$0xff]
    %v243 = vld [vmem:[#allocation7 + $0x4a8] sm:$0xff]
    %v244 = vld [vmem:[#allocation7 + $0x4b0] sm:$0xff]
    %v245 = vld [vmem:[#allocation7 + $0x4b8] sm:$0xff]
    %v246 = vld [vmem:[#allocation7 + $0x4c0] sm:$0xff]
    %v247 = vld [vmem:[#allocation7 + $0x4c8] sm:$0xff]
    %v248 = vld [vmem:[#allocation7 + $0x4d0] sm:$0xff]
    %v249 = vld [vmem:[#allocation7 + $0x4d8] sm:$0xff]
    %v250 = vld [vmem:[#allocation7 + $0x4e0] sm:$0xff]
    %v251 = vld [vmem:[#allocation7 + $0x4e8] sm:$0xff]
    %v252 = vld [vmem:[#allocation7 + $0x4f0] sm:$0xff]
    %v253 = vld [vmem:[#allocation7 + $0x4f8] sm:$0xff]
    %v254 = vld [vmem:[#allocation7 + $0x500] sm:$0xff]
    %v255 = vld [vmem:[#allocation7 + $0x508] sm:$0xff]
    %v256 = vld [vmem:[#allocation7 + $0x510] sm:$0xff]
    %v257 = vld [vmem:[#allocation7 + $0x518] sm:$0xff]
    %v258 = vld [vmem:[#allocation7 + $0x520] sm:$0xff]
    %v259 = vld [vmem:[#allocation7 + $0x528] sm:$0xff]
    %v260 = vld [vmem:[#allocation7 + $0x530] sm:$0xff]
    %v261 = vld [vmem:[#allocation7 + $0x538] sm:$0xff]
    %v262 = vld [vmem:[#allocation7 + $0x540] sm:$0xff]
    %v263 = vld [vmem:[#allocation7 + $0x548] sm:$0xff]
    %v264 = vld [vmem:[#allocation7 + $0x550] sm:$0xff]
    %v265 = vld [vmem:[#allocation7 + $0x558] sm:$0xff]
    %v266 = vld [vmem:[#allocation7 + $0x560] sm:$0xff]
    %v267 = vld [vmem:[#allocation7 + $0x568] sm:$0xff]
    %v268 = vld [vmem:[#allocation7 + $0x570] sm:$0xff]
    %v269 = vld [vmem:[#allocation7 + $0x578] sm:$0xff]
    %v270 = vld [vmem:[#allocation7 + $0x580] sm:$0xff]
    %v271 = vld [vmem:[#allocation7 + $0x588] sm:$0xff]
    %v272 = vld [vmem:[#allocation7 + $0x590] sm:$0xff]
    %v273 = vld [vmem:[#allocation7 + $0x598] sm:$0xff]
    %v274 = vld [vmem:[#allocation7 + $0x5a0] sm:$0xff]
    %v275 = vld [vmem:[#allocation7 + $0x5a8] sm:$0xff]
    %v276 = vld [vmem:[#allocation7 + $0x5b0] sm:$0xff]
    %v277 = vld [vmem:[#allocation7 + $0x5b8] sm:$0xff]
    %v278 = vld [vmem:[#allocation7 + $0x5c0] sm:$0xff]
    %v279 = vld [vmem:[#allocation7 + $0x5c8] sm:$0xff]
    %v280 = vld [vmem:[#allocation7 + $0x5d0] sm:$0xff]
    %v281 = vld [vmem:[#allocation7 + $0x5d8] sm:$0xff]
    %v282 = vld [vmem:[#allocation7 + $0x5e0] sm:$0xff]
    %v283 = vld [vmem:[#allocation7 + $0x5e8] sm:$0xff]
    %v284 = vld [vmem:[#allocation7 + $0x5f0] sm:$0xff]
    %v285 = vld [vmem:[#allocation7 + $0x5f8] sm:$0xff]
    %v286 = vld [vmem:[%s4] sm:$0xff]
    %v287 = vld [vmem:[%s4 + $0x8] sm:$0xf]
    %v290 = vlaneseq
    %v291 = vshrl.u32 %v290, 7
    %v292 = vsub.s32 0, %v291
    %v293 = vrot.slane %v286, %v292
    %v294 = vlaneseq
    %v295 = vshrl.u32 %v294, 7
    %v296 = vsub.s32 1, %v295
    %v297 = vrot.slane %v286, %v296
    %v298 = vlaneseq
    %v299 = vshrl.u32 %v298, 7
    %v300 = vsub.s32 2, %v299
    %v301 = vrot.slane %v286, %v300
    %v302 = vlaneseq
    %v303 = vshrl.u32 %v302, 7
    %v304 = vsub.s32 3, %v303
    %v305 = vrot.slane %v286, %v304
    %v306 = vlaneseq
    %v307 = vshrl.u32 %v306, 7
    %v308 = vsub.s32 4, %v307
    %v309 = vrot.slane %v286, %v308
    %v310 = vlaneseq
    %v311 = vshrl.u32 %v310, 7
    %v312 = vsub.s32 5, %v311
    %v313 = vrot.slane %v286, %v312
    %v314 = vlaneseq
    %v315 = vshrl.u32 %v314, 7
    %v316 = vsub.s32 6, %v315
    %v317 = vrot.slane %v286, %v316
    %v318 = vlaneseq
    %v319 = vshrl.u32 %v318, 7
    %v320 = vsub.s32 7, %v319
    %v321 = vrot.slane %v286, %v320
    %v322 = vlaneseq
    %v323 = vshrl.u32 %v322, 7
    %v324 = vsub.s32 0, %v323
    %v325 = vrot.slane %v287, %v324
    %v326 = vlaneseq
    %v327 = vshrl.u32 %v326, 7
    %v328 = vsub.s32 1, %v327
    %v329 = vrot.slane %v287, %v328
    %v330 = vlaneseq
    %v331 = vshrl.u32 %v330, 7
    %v332 = vsub.s32 2, %v331
    %v333 = vrot.slane %v287, %v332
    %v334 = vlaneseq
    %v335 = vshrl.u32 %v334, 7
    %v336 = vsub.s32 3, %v335
    %v337 = vrot.slane %v287, %v336
    %350 = vmatprep.subr.mxu0 %v95
    %351 = vmatpush1.msra.mxu0 %v94
    %352 = vmatprep.subr.mxu0 %v107
    %353 = vmatpush1.msra.mxu0 %v106
    %354 = vmatprep.subr.mxu0 %v119
    %355 = vmatpush1.msra.mxu0 %v118
    %356 = vmatprep.subr.mxu0 %v131
    %357 = vmatpush1.msra.mxu0 %v130
    %358 = vmatprep.subr.mxu0 %v143
    %359 = vmatpush1.msra.mxu0 %v142
    %360 = vmatprep.subr.mxu0 %v155
    %361 = vmatpush1.msra.mxu0 %v154
    %362 = vmatprep.subr.mxu0 %v167
    %363 = vmatpush1.msra.mxu0 %v166
    %364 = vmatprep.subr.mxu0 %v179
    %365 = vmatpush1.msra.mxu0 %v178
    %366 = vmatprep.subr.mxu0 %v191
    %367 = vmatpush1.msra.mxu0 %v190
    %368 = vmatprep.subr.mxu0 %v203
    %369 = vmatpush1.msra.mxu0 %v202
    %370 = vmatprep.subr.mxu0 %v215
    %371 = vmatpush1.msra.mxu0 %v214
    %372 = vmatprep.subr.mxu0 %v227
    %373 = vmatpush1.msra.mxu0 %v226
    %374 = vmatprep.subr.mxu0 %v239
    %375 = vmatpush1.msra.mxu0 %v238
    %376 = vmatprep.subr.mxu0 %v251
    %377 = vmatpush1.msra.mxu0 %v250
    %378 = vmatprep.subr.mxu0 %v263
    %379 = vmatpush1.msra.mxu0 %v262
    %380 = vmatprep.subr.mxu0 %v275
    %381 = vmatpush1.msra.mxu0 %v274
    %382 = vmatprep.subr.mxu0 0.0
    %383 = vmatpush1.msra.mxu0 0.0
    %384 = vmatprep.subr.mxu0 0.0
    %385 = vmatpush1.msra.mxu0 0.0
    %386 = vmatprep.subr.mxu0 0.0
    %387 = vmatpush1.msra.mxu0 0.0
    %388 = vmatprep.subr.mxu0 0.0
    %389 = vmatpush1.msra.mxu0 0.0
    %390 = vmatprep.subr.mxu0 0.0
    %391 = vmatpush1.msra.mxu0 0.0
    %392 = vmatprep.subr.mxu0 0.0
    %393 = vmatpush1.msra.mxu0 0.0
    %394 = vmatprep.subr.mxu0 0.0
    %395 = vmatpush1.msra.mxu0 0.0
    %396 = vmatprep.subr.mxu0 0.0
    %397 = vmatpush1.msra.mxu0 0.0
    %398 = vmatprep.subr.mxu0 0.0
    %399 = vmatpush1.msra.mxu0 0.0
    %400 = vmatprep.subr.mxu0 0.0
    %401 = vmatpush1.msra.mxu0 0.0
    %402 = vmatprep.subr.mxu0 0.0
    %403 = vmatpush1.msra.mxu0 0.0
    %404 = vmatprep.subr.mxu0 0.0
    %405 = vmatpush1.msra.mxu0 0.0
    %406 = vmatprep.subr.mxu0 0.0
    %407 = vmatpush1.msra.mxu0 0.0
    %408 = vmatprep.subr.mxu0 0.0
    %409 = vmatpush1.msra.mxu0 0.0
    %410 = vmatprep.subr.mxu0 0.0
    %411 = vmatpush1.msra.mxu0 0.0
    %412 = vmatprep.subr.mxu0 0.0
    %413 = vmatpush1.msra.mxu0 0.0
    %414 = vmatprep.mubr.f32.mxu0 0.0
    %415 = vmatmul.mubr.f32.gmra.mrb[0].mxu0 %v92
    %v416 = vpop.f32.mrb[0].mxu0
    %v417 = vadd.f32 %v293, %v416
    %v418 = vpop.f32.mrb[0].mxu0
    %v419 = vadd.f32 %v297, %v418
    %420 = vmatprep.mubr.f32.mxu0 0.0
    %421 = vmatmul.mubr.f32.gmra.mrb[0].mxu0 %v93
    %v422 = vpop.f32.mrb[0].mxu0
    %v423 = vadd.f32 %v293, %v422
    %v424 = vpop.f32.mrb[0].mxu0
    %v425 = vadd.f32 %v297, %v424
    %426 = vdwg.mxu0
    %427 = vmatprep.subr.mxu0 %v97
    %428 = vmatpush1.msra.mxu0 %v96
    %429 = vmatprep.subr.mxu0 %v109
    %430 = vmatpush1.msra.mxu0 %v108
    %431 = vmatprep.subr.mxu0 %v121
    %432 = vmatpush1.msra.mxu0 %v120
    %433 = vmatprep.subr.mxu0 %v133
    %434 = vmatpush1.msra.mxu0 %v132
    %435 = vmatprep.subr.mxu0 %v145
    %436 = vmatpush1.msra.mxu0 %v144
    %437 = vmatprep.subr.mxu0 %v157
    %438 = vmatpush1.msra.mxu0 %v156
    %439 = vmatprep.subr.mxu0 %v169
    %440 = vmatpush1.msra.mxu0 %v168
    %441 = vmatprep.subr.mxu0 %v181
    %442 = vmatpush1.msra.mxu0 %v180
    %443 = vmatprep.subr.mxu0 %v193
    %444 = vmatpush1.msra.mxu0 %v192
    %445 = vmatprep.subr.mxu0 %v205
    %446 = vmatpush1.msra.mxu0 %v204
    %447 = vmatprep.subr.mxu0 %v217
    %448 = vmatpush1.msra.mxu0 %v216
    %449 = vmatprep.subr.mxu0 %v229
    %450 = vmatpush1.msra.mxu0 %v228
    %451 = vmatprep.subr.mxu0 %v241
    %452 = vmatpush1.msra.mxu0 %v240
    %453 = vmatprep.subr.mxu0 %v253
    %454 = vmatpush1.msra.mxu0 %v252
    %455 = vmatprep.subr.mxu0 %v265
    %456 = vmatpush1.msra.mxu0 %v264
    %457 = vmatprep.subr.mxu0 %v277
    %458 = vmatpush1.msra.mxu0 %v276
    %459 = vmatprep.subr.mxu0 0.0
    %460 = vmatpush1.msra.mxu0 0.0
    %461 = vmatprep.subr.mxu0 0.0
    %462 = vmatpush1.msra.mxu0 0.0
    %463 = vmatprep.subr.mxu0 0.0
    %464 = vmatpush1.msra.mxu0 0.0
    %465 = vmatprep.subr.mxu0 0.0
    %466 = vmatpush1.msra.mxu0 0.0
    %467 = vmatprep.subr.mxu0 0.0
    %468 = vmatpush1.msra.mxu0 0.0
    %469 = vmatprep.subr.mxu0 0.0
    %470 = vmatpush1.msra.mxu0 0.0
    %471 = vmatprep.subr.mxu0 0.0
    %472 = vmatpush1.msra.mxu0 0.0
    %473 = vmatprep.subr.mxu0 0.0
    %474 = vmatpush1.msra.mxu0 0.0
    %475 = vmatprep.subr.mxu0 0.0
    %476 = vmatpush1.msra.mxu0 0.0
    %477 = vmatprep.subr.mxu0 0.0
    %478 = vmatpush1.msra.mxu0 0.0
    %479 = vmatprep.subr.mxu0 0.0
    %480 = vmatpush1.msra.mxu0 0.0
    %481 = vmatprep.subr.mxu0 0.0
    %482 = vmatpush1.msra.mxu0 0.0
    %483 = vmatprep.subr.mxu0 0.0
    %484 = vmatpush1.msra.mxu0 0.0
    %485 = vmatprep.subr.mxu0 0.0
    %486 = vmatpush1.msra.mxu0 0.0
    %487 = vmatprep.subr.mxu0 0.0
    %488 = vmatpush1.msra.mxu0 0.0
    %489 = vmatprep.subr.mxu0 0.0
    %490 = vmatpush1.msra.mxu0 0.0
    %491 = vmatprep.mubr.f32.mxu0 0.0
    %492 = vmatmul.mubr.f32.gmra.mrb[0].mxu0 %v92
    %v493 = vpop.f32.mrb[0].mxu0
    %v494 = vadd.f32 %v301, %v493
    %v495 = vpop.f32.mrb[0].mxu0
    %v496 = vadd.f32 %v305, %v495
    %497 = vmatprep.mubr.f32.mxu0 0.0
    %498 = vmatmul.mubr.f32.gmra.mrb[0].mxu0 %v93
    %v499 = vpop.f32.mrb[0].mxu0
    %v500 = vadd.f32 %v301, %v499
    %v501 = vpop.f32.mrb[0].mxu0
    %v502 = vadd.f32 %v305, %v501
    %503 = vdwg.mxu0
    %504 = vmatprep.subr.mxu0 %v99
    %505 = vmatpush1.msra.mxu0 %v98
    %506 = vmatprep.subr.mxu0 %v111
    %507 = vmatpush1.msra.mxu0 %v110
    %508 = vmatprep.subr.mxu0 %v123
    %509 = vmatpush1.msra.mxu0 %v122
    %510 = vmatprep.subr.mxu0 %v135
    %511 = vmatpush1.msra.mxu0 %v134
    %512 = vmatprep.subr.mxu0 %v147
    %513 = vmatpush1.msra.mxu0 %v146
    %514 = vmatprep.subr.mxu0 %v159
    %515 = vmatpush1.msra.mxu0 %v158
    %516 = vmatprep.subr.mxu0 %v171
    %517 = vmatpush1.msra.mxu0 %v170
    %518 = vmatprep.subr.mxu0 %v183
    %519 = vmatpush1.msra.mxu0 %v182
    %520 = vmatprep.subr.mxu0 %v195
    %521 = vmatpush1.msra.mxu0 %v194
    %522 = vmatprep.subr.mxu0 %v207
    %523 = vmatpush1.msra.mxu0 %v206
    %524 = vmatprep.subr.mxu0 %v219
    %525 = vmatpush1.msra.mxu0 %v218
    %526 = vmatprep.subr.mxu0 %v231
    %527 = vmatpush1.msra.mxu0 %v230
    %528 = vmatprep.subr.mxu0 %v243
    %529 = vmatpush1.msra.mxu0 %v242
    %530 = vmatprep.subr.mxu0 %v255
    %531 = vmatpush1.msra.mxu0 %v254
    %532 = vmatprep.subr.mxu0 %v267
    %533 = vmatpush1.msra.mxu0 %v266
    %534 = vmatprep.subr.mxu0 %v279
    %535 = vmatpush1.msra.mxu0 %v278
    %536 = vmatprep.subr.mxu0 0.0
    %537 = vmatpush1.msra.mxu0 0.0
    %538 = vmatprep.subr.mxu0 0.0
    %539 = vmatpush1.msra.mxu0 0.0
    %540 = vmatprep.subr.mxu0 0.0
    %541 = vmatpush1.msra.mxu0 0.0
    %542 = vmatprep.subr.mxu0 0.0
    %543 = vmatpush1.msra.mxu0 0.0
    %544 = vmatprep.subr.mxu0 0.0
    %545 = vmatpush1.msra.mxu0 0.0
    %546 = vmatprep.subr.mxu0 0.0
    %547 = vmatpush1.msra.mxu0 0.0
    %548 = vmatprep.subr.mxu0 0.0
    %549 = vmatpush1.msra.mxu0 0.0
    %550 = vmatprep.subr.mxu0 0.0
    %551 = vmatpush1.msra.mxu0 0.0
    %552 = vmatprep.subr.mxu0 0.0
    %553 = vmatpush1.msra.mxu0 0.0
    %554 = vmatprep.subr.mxu0 0.0
    %555 = vmatpush1.msra.mxu0 0.0
    %556 = vmatprep.subr.mxu0 0.0
    %557 = vmatpush1.msra.mxu0 0.0
    %558 = vmatprep.subr.mxu0 0.0
    %559 = vmatpush1.msra.mxu0 0.0
    %560 = vmatprep.subr.mxu0 0.0
    %561 = vmatpush1.msra.mxu0 0.0
    %562 = vmatprep.subr.mxu0 0.0
    %563 = vmatpush1.msra.mxu0 0.0
    %564 = vmatprep.subr.mxu0 0.0
    %565 = vmatpush1.msra.mxu0 0.0
    %566 = vmatprep.subr.mxu0 0.0
    %567 = vmatpush1.msra.mxu0 0.0
    %568 = vmatprep.mubr.f32.mxu0 0.0
    %569 = vmatmul.mubr.f32.gmra.mrb[0].mxu0 %v92
    %v570 = vpop.f32.mrb[0].mxu0
    %v571 = vadd.f32 %v309, %v570
    %v572 = vpop.f32.mrb[0].mxu0
    %v573 = vadd.f32 %v313, %v572
    %574 = vmatprep.mubr.f32.mxu0 0.0
    %575 = vmatmul.mubr.f32.gmra.mrb[0].mxu0 %v93
    %v576 = vpop.f32.mrb[0].mxu0
    %v577 = vadd.f32 %v309, %v576
    %v578 = vpop.f32.mrb[0].mxu0
    %v579 = vadd.f32 %v313, %v578
    %580 = vdwg.mxu0
    %581 = vmatprep.subr.mxu0 %v101
    %582 = vmatpush1.msra.mxu0 %v100
    %583 = vmatprep.subr.mxu0 %v113
    %584 = vmatpush1.msra.mxu0 %v112
    %585 = vmatprep.subr.mxu0 %v125
    %586 = vmatpush1.msra.mxu0 %v124
    %587 = vmatprep.subr.mxu0 %v137
    %588 = vmatpush1.msra.mxu0 %v136
    %589 = vmatprep.subr.mxu0 %v149
    %590 = vmatpush1.msra.mxu0 %v148
    %591 = vmatprep.subr.mxu0 %v161
    %592 = vmatpush1.msra.mxu0 %v160
    %593 = vmatprep.subr.mxu0 %v173
    %594 = vmatpush1.msra.mxu0 %v172
    %595 = vmatprep.subr.mxu0 %v185
    %596 = vmatpush1.msra.mxu0 %v184
    %597 = vmatprep.subr.mxu0 %v197
    %598 = vmatpush1.msra.mxu0 %v196
    %599 = vmatprep.subr.mxu0 %v209
    %600 = vmatpush1.msra.mxu0 %v208
    %601 = vmatprep.subr.mxu0 %v221
    %602 = vmatpush1.msra.mxu0 %v220
    %603 = vmatprep.subr.mxu0 %v233
    %604 = vmatpush1.msra.mxu0 %v232
    %605 = vmatprep.subr.mxu0 %v245
    %606 = vmatpush1.msra.mxu0 %v244
    %607 = vmatprep.subr.mxu0 %v257
    %608 = vmatpush1.msra.mxu0 %v256
    %609 = vmatprep.subr.mxu0 %v269
    %610 = vmatpush1.msra.mxu0 %v268
    %611 = vmatprep.subr.mxu0 %v281
    %612 = vmatpush1.msra.mxu0 %v280
    %613 = vmatprep.subr.mxu0 0.0
    %614 = vmatpush1.msra.mxu0 0.0
    %615 = vmatprep.subr.mxu0 0.0
    %616 = vmatpush1.msra.mxu0 0.0
    %617 = vmatprep.subr.mxu0 0.0
    %618 = vmatpush1.msra.mxu0 0.0
    %619 = vmatprep.subr.mxu0 0.0
    %620 = vmatpush1.msra.mxu0 0.0
    %621 = vmatprep.subr.mxu0 0.0
    %622 = vmatpush1.msra.mxu0 0.0
    %623 = vmatprep.subr.mxu0 0.0
    %624 = vmatpush1.msra.mxu0 0.0
    %625 = vmatprep.subr.mxu0 0.0
    %626 = vmatpush1.msra.mxu0 0.0
    %627 = vmatprep.subr.mxu0 0.0
    %628 = vmatpush1.msra.mxu0 0.0
    %629 = vmatprep.subr.mxu0 0.0
    %630 = vmatpush1.msra.mxu0 0.0
    %631 = vmatprep.subr.mxu0 0.0
    %632 = vmatpush1.msra.mxu0 0.0
    %633 = vmatprep.subr.mxu0 0.0
    %634 = vmatpush1.msra.mxu0 0.0
    %635 = vmatprep.subr.mxu0 0.0
    %636 = vmatpush1.msra.mxu0 0.0
    %637 = vmatprep.subr.mxu0 0.0
    %638 = vmatpush1.msra.mxu0 0.0
    %639 = vmatprep.subr.mxu0 0.0
    %640 = vmatpush1.msra.mxu0 0.0
    %641 = vmatprep.subr.mxu0 0.0
    %642 = vmatpush1.msra.mxu0 0.0
    %643 = vmatprep.subr.mxu0 0.0
    %644 = vmatpush1.msra.mxu0 0.0
    %645 = vmatprep.mubr.f32.mxu0 0.0
    %646 = vmatmul.mubr.f32.gmra.mrb[0].mxu0 %v92
    %v647 = vpop.f32.mrb[0].mxu0
    %v648 = vadd.f32 %v317, %v647
    %v649 = vpop.f32.mrb[0].mxu0
    %v650 = vadd.f32 %v321, %v649
    %651 = vmatprep.mubr.f32.mxu0 0.0
    %652 = vmatmul.mubr.f32.gmra.mrb[0].mxu0 %v93
    %v653 = vpop.f32.mrb[0].mxu0
    %v654 = vadd.f32 %v317, %v653
    %v655 = vpop.f32.mrb[0].mxu0
    %v656 = vadd.f32 %v321, %v655
    %657 = vdwg.mxu0
    %658 = vmatprep.subr.mxu0 %v103
    %659 = vmatpush1.msra.mxu0 %v102
    %660 = vmatprep.subr.mxu0 %v115
    %661 = vmatpush1.msra.mxu0 %v114
    %662 = vmatprep.subr.mxu0 %v127
    %663 = vmatpush1.msra.mxu0 %v126
    %664 = vmatprep.subr.mxu0 %v139
    %665 = vmatpush1.msra.mxu0 %v138
    %666 = vmatprep.subr.mxu0 %v151
    %667 = vmatpush1.msra.mxu0 %v150
    %668 = vmatprep.subr.mxu0 %v163
    %669 = vmatpush1.msra.mxu0 %v162
    %670 = vmatprep.subr.mxu0 %v175
    %671 = vmatpush1.msra.mxu0 %v174
    %672 = vmatprep.subr.mxu0 %v187
    %673 = vmatpush1.msra.mxu0 %v186
    %674 = vmatprep.subr.mxu0 %v199
    %675 = vmatpush1.msra.mxu0 %v198
    %676 = vmatprep.subr.mxu0 %v211
    %677 = vmatpush1.msra.mxu0 %v210
    %678 = vmatprep.subr.mxu0 %v223
    %679 = vmatpush1.msra.mxu0 %v222
    %680 = vmatprep.subr.mxu0 %v235
    %681 = vmatpush1.msra.mxu0 %v234
    %682 = vmatprep.subr.mxu0 %v247
    %683 = vmatpush1.msra.mxu0 %v246
    %684 = vmatprep.subr.mxu0 %v259
    %685 = vmatpush1.msra.mxu0 %v258
    %686 = vmatprep.subr.mxu0 %v271
    %687 = vmatpush1.msra.mxu0 %v270
    %688 = vmatprep.subr.mxu0 %v283
    %689 = vmatpush1.msra.mxu0 %v282
    %690 = vmatprep.subr.mxu0 0.0
    %691 = vmatpush1.msra.mxu0 0.0
    %692 = vmatprep.subr.mxu0 0.0
    %693 = vmatpush1.msra.mxu0 0.0
    %694 = vmatprep.subr.mxu0 0.0
    %695 = vmatpush1.msra.mxu0 0.0
    %696 = vmatprep.subr.mxu0 0.0
    %697 = vmatpush1.msra.mxu0 0.0
    %698 = vmatprep.subr.mxu0 0.0
    %699 = vmatpush1.msra.mxu0 0.0
    %700 = vmatprep.subr.mxu0 0.0
    %701 = vmatpush1.msra.mxu0 0.0
    %702 = vmatprep.subr.mxu0 0.0
    %703 = vmatpush1.msra.mxu0 0.0
    %704 = vmatprep.subr.mxu0 0.0
    %705 = vmatpush1.msra.mxu0 0.0
    %706 = vmatprep.subr.mxu0 0.0
    %707 = vmatpush1.msra.mxu0 0.0
    %708 = vmatprep.subr.mxu0 0.0
    %709 = vmatpush1.msra.mxu0 0.0
    %710 = vmatprep.subr.mxu0 0.0
    %711 = vmatpush1.msra.mxu0 0.0
    %712 = vmatprep.subr.mxu0 0.0
    %713 = vmatpush1.msra.mxu0 0.0
    %714 = vmatprep.subr.mxu0 0.0
    %715 = vmatpush1.msra.mxu0 0.0
    %716 = vmatprep.subr.mxu0 0.0
    %717 = vmatpush1.msra.mxu0 0.0
    %718 = vmatprep.subr.mxu0 0.0
    %719 = vmatpush1.msra.mxu0 0.0
    %720 = vmatprep.subr.mxu0 0.0
    %721 = vmatpush1.msra.mxu0 0.0
    %722 = vmatprep.mubr.f32.mxu0 0.0
    %723 = vmatmul.mubr.f32.gmra.mrb[0].mxu0 %v92
    %v724 = vpop.f32.mrb[0].mxu0
    %v725 = vadd.f32 %v325, %v724
    %v726 = vpop.f32.mrb[0].mxu0
    %v727 = vadd.f32 %v329, %v726
    %728 = vmatprep.mubr.f32.mxu0 0.0
    %729 = vmatmul.mubr.f32.gmra.mrb[0].mxu0 %v93
    %v730 = vpop.f32.mrb[0].mxu0
    %v731 = vadd.f32 %v325, %v730
    %v732 = vpop.f32.mrb[0].mxu0
    %v733 = vadd.f32 %v329, %v732
    %734 = vdwg.mxu0
    %735 = vmatprep.subr.mxu0 %v105
    %736 = vmatpush1.msra.mxu0 %v104
    %737 = vmatprep.subr.mxu0 %v117
    %738 = vmatpush1.msra.mxu0 %v116
    %739 = vmatprep.subr.mxu0 %v129
    %740 = vmatpush1.msra.mxu0 %v128
    %741 = vmatprep.subr.mxu0 %v141
    %742 = vmatpush1.msra.mxu0 %v140
    %743 = vmatprep.subr.mxu0 %v153
    %744 = vmatpush1.msra.mxu0 %v152
    %745 = vmatprep.subr.mxu0 %v165
    %746 = vmatpush1.msra.mxu0 %v164
    %747 = vmatprep.subr.mxu0 %v177
    %748 = vmatpush1.msra.mxu0 %v176
    %749 = vmatprep.subr.mxu0 %v189
    %750 = vmatpush1.msra.mxu0 %v188
    %751 = vmatprep.subr.mxu0 %v201
    %752 = vmatpush1.msra.mxu0 %v200
    %753 = vmatprep.subr.mxu0 %v213
    %754 = vmatpush1.msra.mxu0 %v212
    %755 = vmatprep.subr.mxu0 %v225
    %756 = vmatpush1.msra.mxu0 %v224
    %757 = vmatprep.subr.mxu0 %v237
    %758 = vmatpush1.msra.mxu0 %v236
    %759 = vmatprep.subr.mxu0 %v249
    %760 = vmatpush1.msra.mxu0 %v248
    %761 = vmatprep.subr.mxu0 %v261
    %762 = vmatpush1.msra.mxu0 %v260
    %763 = vmatprep.subr.mxu0 %v273
    %764 = vmatpush1.msra.mxu0 %v272
    %765 = vmatprep.subr.mxu0 %v285
    %766 = vmatpush1.msra.mxu0 %v284
    %767 = vmatprep.subr.mxu0 0.0
    %768 = vmatpush1.msra.mxu0 0.0
    %769 = vmatprep.subr.mxu0 0.0
    %770 = vmatpush1.msra.mxu0 0.0
    %771 = vmatprep.subr.mxu0 0.0
    %772 = vmatpush1.msra.mxu0 0.0
    %773 = vmatprep.subr.mxu0 0.0
    %774 = vmatpush1.msra.mxu0 0.0
    %775 = vmatprep.subr.mxu0 0.0
    %776 = vmatpush1.msra.mxu0 0.0
    %777 = vmatprep.subr.mxu0 0.0
    %778 = vmatpush1.msra.mxu0 0.0
    %779 = vmatprep.subr.mxu0 0.0
    %780 = vmatpush1.msra.mxu0 0.0
    %781 = vmatprep.subr.mxu0 0.0
    %782 = vmatpush1.msra.mxu0 0.0
    %783 = vmatprep.subr.mxu0 0.0
    %784 = vmatpush1.msra.mxu0 0.0
    %785 = vmatprep.subr.mxu0 0.0
    %786 = vmatpush1.msra.mxu0 0.0
    %787 = vmatprep.subr.mxu0 0.0
    %788 = vmatpush1.msra.mxu0 0.0
    %789 = vmatprep.subr.mxu0 0.0
    %790 = vmatpush1.msra.mxu0 0.0
    %791 = vmatprep.subr.mxu0 0.0
    %792 = vmatpush1.msra.mxu0 0.0
    %793 = vmatprep.subr.mxu0 0.0
    %794 = vmatpush1.msra.mxu0 0.0
    %795 = vmatprep.subr.mxu0 0.0
    %796 = vmatpush1.msra.mxu0 0.0
    %797 = vmatprep.subr.mxu0 0.0
    %798 = vmatpush1.msra.mxu0 0.0
    %799 = vmatprep.mubr.f32.mxu0 0.0
    %800 = vmatmul.mubr.f32.gmra.mrb[0].mxu0 %v92
    %v801 = vpop.f32.mrb[0].mxu0
    %v802 = vadd.f32 %v333, %v801
    %v803 = vpop.f32.mrb[0].mxu0
    %v804 = vadd.f32 %v337, %v803
    %805 = vmatprep.mubr.f32.mxu0 0.0
    %806 = vmatmul.mubr.f32.gmra.mrb[0].mxu0 %v93
    %v807 = vpop.f32.mrb[0].mxu0
    %v808 = vadd.f32 %v333, %v807
    %v809 = vpop.f32.mrb[0].mxu0
    %v810 = vadd.f32 %v337, %v809
    %811 = vdwg.mxu0
    %v812 = vld [vmem:[%s2] sm:$0x1]
    %v813 = vld [vmem:[%s2 + $0x1] sm:$0x1]
    %v816 = vlaneseq
    %v817 = vshrl.u32 %v816, 7
    %v818 = vsub.s32 0, %v817
    %v819 = vrot.slane %v812, %v818
    %v820 = vlaneseq
    %v821 = vshrl.u32 %v820, 7
    %v822 = vsub.s32 0, %v821
    %v823 = vrot.slane %v813, %v822
    %826 = vmatprep.subr.mxu0 0.0
    %827 = vmatpush1.xpose.msra.mxu0 %v571
    %828 = vmatprep.subr.mxu0 0.0
    %829 = vmatpush1.xpose.msra.mxu0 0.0
    %830 = vmatprep.subr.mxu0 0.0
    %831 = vmatpush1.xpose.msra.mxu0 0.0
    %832 = vmatprep.subr.mxu0 0.0
    %833 = vmatpush1.xpose.msra.mxu0 0.0
    %834 = vmatprep.subr.mxu0 0.0
    %835 = vmatpush1.xpose.msra.mxu0 0.0
    %836 = vmatprep.subr.mxu0 0.0
    %837 = vmatpush1.xpose.msra.mxu0 0.0
    %838 = vmatprep.subr.mxu0 0.0
    %839 = vmatpush1.xpose.msra.mxu0 0.0
    %840 = vmatprep.subr.mxu0 0.0
    %841 = vmatpush1.xpose.msra.mxu0 0.0
    %842 = vmatprep.subr.mxu0 0.0
    %843 = vmatpush1.xpose.msra.mxu0 0.0
    %844 = vmatprep.subr.mxu0 0.0
    %845 = vmatpush1.xpose.msra.mxu0 0.0
    %846 = vmatprep.subr.mxu0 0.0
    %847 = vmatpush1.xpose.msra.mxu0 0.0
    %848 = vmatprep.subr.mxu0 0.0
    %849 = vmatpush1.xpose.msra.mxu0 0.0
    %850 = vmatprep.subr.mxu0 0.0
    %851 = vmatpush1.xpose.msra.mxu0 0.0
    %852 = vmatprep.subr.mxu0 0.0
    %853 = vmatpush1.xpose.msra.mxu0 0.0
    %854 = vmatprep.subr.mxu0 0.0
    %855 = vmatpush1.xpose.msra.mxu0 0.0
    %856 = vmatprep.subr.mxu0 0.0
    %857 = vmatpush1.xpose.msra.mxu0 0.0
    %858 = vmatprep.subr.mxu0 0.0
    %859 = vmatpush1.xpose.msra.mxu0 0.0
    %860 = vmatprep.subr.mxu0 0.0
    %861 = vmatpush1.xpose.msra.mxu0 0.0
    %862 = vmatprep.subr.mxu0 0.0
    %863 = vmatpush1.xpose.msra.mxu0 0.0
    %864 = vmatprep.subr.mxu0 0.0
    %865 = vmatpush1.xpose.msra.mxu0 0.0
    %866 = vmatprep.subr.mxu0 0.0
    %867 = vmatpush1.xpose.msra.mxu0 0.0
    %868 = vmatprep.subr.mxu0 0.0
    %869 = vmatpush1.xpose.msra.mxu0 0.0
    %870 = vmatprep.subr.mxu0 0.0
    %871 = vmatpush1.xpose.msra.mxu0 0.0
    %872 = vmatprep.subr.mxu0 0.0
    %873 = vmatpush1.xpose.msra.mxu0 0.0
    %874 = vmatprep.subr.mxu0 0.0
    %875 = vmatpush1.xpose.msra.mxu0 0.0
    %876 = vmatprep.subr.mxu0 0.0
    %877 = vmatpush1.xpose.msra.mxu0 0.0
    %878 = vmatprep.subr.mxu0 0.0
    %879 = vmatpush1.xpose.msra.mxu0 0.0
    %880 = vmatprep.subr.mxu0 0.0
    %881 = vmatpush1.xpose.msra.mxu0 0.0
    %882 = vmatprep.subr.mxu0 0.0
    %883 = vmatpush1.xpose.msra.mxu0 0.0
    %884 = vmatprep.subr.mxu0 0.0
    %885 = vmatpush1.xpose.msra.mxu0 0.0
    %886 = vmatprep.subr.mxu0 0.0
    %887 = vmatpush1.xpose.msra.mxu0 0.0
    %888 = vmatprep.subr.mxu0 0.0
    %889 = vmatpush1.xpose.msra.mxu0 0.0
    %890 = vmatprep.mubr.f32.mxu0 0.0
    %891 = vmatmul.mubr.f32.gmra.mrb[0].mxu0 %v417
    %v892 = vpop.f32.mrb[0].mxu0
    %v893 = vadd.f32 %v819, %v892
    %v894 = vpop.f32.mrb[0].mxu0
    %895 = vdwg.mxu0
    %896 = vmatprep.subr.mxu0 0.0
    %897 = vmatpush1.xpose.msra.mxu0 %v577
    %898 = vmatprep.subr.mxu0 0.0
    %899 = vmatpush1.xpose.msra.mxu0 0.0
    %900 = vmatprep.subr.mxu0 0.0
    %901 = vmatpush1.xpose.msra.mxu0 0.0
    %902 = vmatprep.subr.mxu0 0.0
    %903 = vmatpush1.xpose.msra.mxu0 0.0
    %904 = vmatprep.subr.mxu0 0.0
    %905 = vmatpush1.xpose.msra.mxu0 0.0
    %906 = vmatprep.subr.mxu0 0.0
    %907 = vmatpush1.xpose.msra.mxu0 0.0
    %908 = vmatprep.subr.mxu0 0.0
    %909 = vmatpush1.xpose.msra.mxu0 0.0
    %910 = vmatprep.subr.mxu0 0.0
    %911 = vmatpush1.xpose.msra.mxu0 0.0
    %912 = vmatprep.subr.mxu0 0.0
    %913 = vmatpush1.xpose.msra.mxu0 0.0
    %914 = vmatprep.subr.mxu0 0.0
    %915 = vmatpush1.xpose.msra.mxu0 0.0
    %916 = vmatprep.subr.mxu0 0.0
    %917 = vmatpush1.xpose.msra.mxu0 0.0
    %918 = vmatprep.subr.mxu0 0.0
    %919 = vmatpush1.xpose.msra.mxu0 0.0
    %920 = vmatprep.subr.mxu0 0.0
    %921 = vmatpush1.xpose.msra.mxu0 0.0
    %922 = vmatprep.subr.mxu0 0.0
    %923 = vmatpush1.xpose.msra.mxu0 0.0
    %924 = vmatprep.subr.mxu0 0.0
    %925 = vmatpush1.xpose.msra.mxu0 0.0
    %926 = vmatprep.subr.mxu0 0.0
    %927 = vmatpush1.xpose.msra.mxu0 0.0
    %928 = vmatprep.subr.mxu0 0.0
    %929 = vmatpush1.xpose.msra.mxu0 0.0
    %930 = vmatprep.subr.mxu0 0.0
    %931 = vmatpush1.xpose.msra.mxu0 0.0
    %932 = vmatprep.subr.mxu0 0.0
    %933 = vmatpush1.xpose.msra.mxu0 0.0
    %934 = vmatprep.subr.mxu0 0.0
    %935 = vmatpush1.xpose.msra.mxu0 0.0
    %936 = vmatprep.subr.mxu0 0.0
    %937 = vmatpush1.xpose.msra.mxu0 0.0
    %938 = vmatprep.subr.mxu0 0.0
    %939 = vmatpush1.xpose.msra.mxu0 0.0
    %940 = vmatprep.subr.mxu0 0.0
    %941 = vmatpush1.xpose.msra.mxu0 0.0
    %942 = vmatprep.subr.mxu0 0.0
    %943 = vmatpush1.xpose.msra.mxu0 0.0
    %944 = vmatprep.subr.mxu0 0.0
    %945 = vmatpush1.xpose.msra.mxu0 0.0
    %946 = vmatprep.subr.mxu0 0.0
    %947 = vmatpush1.xpose.msra.mxu0 0.0
    %948 = vmatprep.subr.mxu0 0.0
    %949 = vmatpush1.xpose.msra.mxu0 0.0
    %950 = vmatprep.subr.mxu0 0.0
    %951 = vmatpush1.xpose.msra.mxu0 0.0
    %952 = vmatprep.subr.mxu0 0.0
    %953 = vmatpush1.xpose.msra.mxu0 0.0
    %954 = vmatprep.subr.mxu0 0.0
    %955 = vmatpush1.xpose.msra.mxu0 0.0
    %956 = vmatprep.subr.mxu0 0.0
    %957 = vmatpush1.xpose.msra.mxu0 0.0
    %958 = vmatprep.subr.mxu0 0.0
    %959 = vmatpush1.xpose.msra.mxu0 0.0
    %960 = vmatprep.mubr.f32.mxu0 0.0
    %961 = vmatmul.mubr.f32.gmra.mrb[0].mxu0 %v423
    %v962 = vpop.f32.mrb[0].mxu0
    %v963 = vadd.f32 %v823, %v962
    %v964 = vpop.f32.mrb[0].mxu0
    %965 = vdwg.mxu0
    %vm966 = vcmask 64512
    %v967 = vsel %vm966, %v893, -inf
    %968 = vmax.xlane.f32.xlu0 %v967
    %v969 = vpop.xlane.xlu0 %968
    %v970 = vsel %vm966, %v963, -inf
    %971 = vmax.xlane.f32.xlu0 %v970
    %v972 = vpop.xlane.xlu0 %971
    %v973 = vsub.f32 %v893, %v969
    %v974 = vsub.f32 %v963, %v972
    %v975 = vmul.f32 %v973, 1.442695
    %v976 = vpow.pop %v975
    %v977 = vmul.f32 %v974, 1.442695
    %v978 = vpow.pop %v977
    %v979 = vsel %vm966, %v976, 0.0
    %980 = vadd.xlane.f32.xlu0 %v979
    %v981 = vpop.xlane.xlu0 %980
    %v982 = vsel %vm966, %v978, 0.0
    %983 = vadd.xlane.f32.xlu0 %v982
    %v984 = vpop.xlane.xlu0 %983
    %v985 = vrcp.pop %v981
    %v986 = vrcp.pop %v984
    %v987 = vmul.f32 %v976, %v985
    %v988 = vmul.f32 %v978, %v986
    %v990 = vsel %vm966, %v987, 0
    %992 = vmatprep.subr.mxu0 0.0
    %993 = vmatpush1.msra.mxu0 %v725
    %994 = vmatprep.subr.mxu0 0.0
    %995 = vmatpush1.msra.mxu0 0.0
    %996 = vmatprep.subr.mxu0 0.0
    %997 = vmatpush1.msra.mxu0 0.0
    %998 = vmatprep.subr.mxu0 0.0
    %999 = vmatpush1.msra.mxu0 0.0
    %1000 = vmatprep.subr.mxu0 0.0
    %1001 = vmatpush1.msra.mxu0 0.0
    %1002 = vmatprep.subr.mxu0 0.0
    %1003 = vmatpush1.msra.mxu0 0.0
    %1004 = vmatprep.subr.mxu0 0.0
    %1005 = vmatpush1.msra.mxu0 0.0
    %1006 = vmatprep.subr.mxu0 0.0
    %1007 = vmatpush1.msra.mxu0 0.0
    %1008 = vmatprep.subr.mxu0 0.0
    %1009 = vmatpush1.msra.mxu0 0.0
    %1010 = vmatprep.subr.mxu0 0.0
    %1011 = vmatpush1.msra.mxu0 0.0
    %1012 = vmatprep.subr.mxu0 0.0
    %1013 = vmatpush1.msra.mxu0 0.0
    %1014 = vmatprep.subr.mxu0 0.0
    %1015 = vmatpush1.msra.mxu0 0.0
    %1016 = vmatprep.subr.mxu0 0.0
    %1017 = vmatpush1.msra.mxu0 0.0
    %1018 = vmatprep.subr.mxu0 0.0
    %1019 = vmatpush1.msra.mxu0 0.0
    %1020 = vmatprep.subr.mxu0 0.0
    %1021 = vmatpush1.msra.mxu0 0.0
    %1022 = vmatprep.subr.mxu0 0.0
    %1023 = vmatpush1.msra.mxu0 0.0
    %1024 = vmatprep.subr.mxu0 0.0
    %1025 = vmatpush1.msra.mxu0 0.0
    %1026 = vmatprep.subr.mxu0 0.0
    %1027 = vmatpush1.msra.mxu0 0.0
    %1028 = vmatprep.subr.mxu0 0.0
    %1029 = vmatpush1.msra.mxu0 0.0
    %1030 = vmatprep.subr.mxu0 0.0
    %1031 = vmatpush1.msra.mxu0 0.0
    %1032 = vmatprep.subr.mxu0 0.0
    %1033 = vmatpush1.msra.mxu0 0.0
    %1034 = vmatprep.subr.mxu0 0.0
    %1035 = vmatpush1.msra.mxu0 0.0
    %1036 = vmatprep.subr.mxu0 0.0
    %1037 = vmatpush1.msra.mxu0 0.0
    %1038 = vmatprep.subr.mxu0 0.0
    %1039 = vmatpush1.msra.mxu0 0.0
    %1040 = vmatprep.subr.mxu0 0.0
    %1041 = vmatpush1.msra.mxu0 0.0
    %1042 = vmatprep.subr.mxu0 0.0
    %1043 = vmatpush1.msra.mxu0 0.0
    %1044 = vmatprep.subr.mxu0 0.0
    %1045 = vmatpush1.msra.mxu0 0.0
    %1046 = vmatprep.subr.mxu0 0.0
    %1047 = vmatpush1.msra.mxu0 0.0
    %1048 = vmatprep.subr.mxu0 0.0
    %1049 = vmatpush1.msra.mxu0 0.0
    %1050 = vmatprep.subr.mxu0 0.0
    %1051 = vmatpush1.msra.mxu0 0.0
    %1052 = vmatprep.subr.mxu0 0.0
    %1053 = vmatpush1.msra.mxu0 0.0
    %1054 = vmatprep.subr.mxu0 0.0
    %1055 = vmatpush1.msra.mxu0 0.0
    %1056 = vmatprep.mubr.f32.mxu0 0.0
    %1057 = vmatmul.mubr.f32.gmra.mrb[0].mxu0 %v990
    %v1058 = vpop.f32.mrb[0].mxu0
    %v1059 = vadd.f32 0.0, %v1058
    %v1060 = vpop.f32.mrb[0].mxu0
    %1061 = vdwg.mxu0
    %v1063 = vsel %vm966, %v988, 0
    %1065 = vmatprep.subr.mxu0 0.0
    %1066 = vmatpush1.msra.mxu0 %v731
    %1067 = vmatprep.subr.mxu0 0.0
    %1068 = vmatpush1.msra.mxu0 0.0
    %1069 = vmatprep.subr.mxu0 0.0
    %1070 = vmatpush1.msra.mxu0 0.0
    %1071 = vmatprep.subr.mxu0 0.0
    %1072 = vmatpush1.msra.mxu0 0.0
    %1073 = vmatprep.subr.mxu0 0.0
    %1074 = vmatpush1.msra.mxu0 0.0
    %1075 = vmatprep.subr.mxu0 0.0
    %1076 = vmatpush1.msra.mxu0 0.0
    %1077 = vmatprep.subr.mxu0 0.0
    %1078 = vmatpush1.msra.mxu0 0.0
    %1079 = vmatprep.subr.mxu0 0.0
    %1080 = vmatpush1.msra.mxu0 0.0
    %1081 = vmatprep.subr.mxu0 0.0
    %1082 = vmatpush1.msra.mxu0 0.0
    %1083 = vmatprep.subr.mxu0 0.0
    %1084 = vmatpush1.msra.mxu0 0.0
    %1085 = vmatprep.subr.mxu0 0.0
    %1086 = vmatpush1.msra.mxu0 0.0
    %1087 = vmatprep.subr.mxu0 0.0
    %1088 = vmatpush1.msra.mxu0 0.0
    %1089 = vmatprep.subr.mxu0 0.0
    %1090 = vmatpush1.msra.mxu0 0.0
    %1091 = vmatprep.subr.mxu0 0.0
    %1092 = vmatpush1.msra.mxu0 0.0
    %1093 = vmatprep.subr.mxu0 0.0
    %1094 = vmatpush1.msra.mxu0 0.0
    %1095 = vmatprep.subr.mxu0 0.0
    %1096 = vmatpush1.msra.mxu0 0.0
    %1097 = vmatprep.subr.mxu0 0.0
    %1098 = vmatpush1.msra.mxu0 0.0
    %1099 = vmatprep.subr.mxu0 0.0
    %1100 = vmatpush1.msra.mxu0 0.0
    %1101 = vmatprep.subr.mxu0 0.0
    %1102 = vmatpush1.msra.mxu0 0.0
    %1103 = vmatprep.subr.mxu0 0.0
    %1104 = vmatpush1.msra.mxu0 0.0
    %1105 = vmatprep.subr.mxu0 0.0
    %1106 = vmatpush1.msra.mxu0 0.0
    %1107 = vmatprep.subr.mxu0 0.0
    %1108 = vmatpush1.msra.mxu0 0.0
    %1109 = vmatprep.subr.mxu0 0.0
    %1110 = vmatpush1.msra.mxu0 0.0
    %1111 = vmatprep.subr.mxu0 0.0
    %1112 = vmatpush1.msra.mxu0 0.0
    %1113 = vmatprep.subr.mxu0 0.0
    %1114 = vmatpush1.msra.mxu0 0.0
    %1115 = vmatprep.subr.mxu0 0.0
    %1116 = vmatpush1.msra.mxu0 0.0
    %1117 = vmatprep.subr.mxu0 0.0
    %1118 = vmatpush1.msra.mxu0 0.0
    %1119 = vmatprep.subr.mxu0 0.0
    %1120 = vmatpush1.msra.mxu0 0.0
    %1121 = vmatprep.subr.mxu0 0.0
    %1122 = vmatpush1.msra.mxu0 0.0
    %1123 = vmatprep.subr.mxu0 0.0
    %1124 = vmatpush1.msra.mxu0 0.0
    %1125 = vmatprep.subr.mxu0 0.0
    %1126 = vmatpush1.msra.mxu0 0.0
    %1127 = vmatprep.subr.mxu0 0.0
    %1128 = vmatpush1.msra.mxu0 0.0
    %1129 = vmatprep.mubr.f32.mxu0 0.0
    %1130 = vmatmul.mubr.f32.gmra.mrb[0].mxu0 %v1063
    %v1131 = vpop.f32.mrb[0].mxu0
    %v1132 = vadd.f32 0.0, %v1131
    %v1133 = vpop.f32.mrb[0].mxu0
    %1134 = vdwg.mxu0
    %1135 = vst [vmem:[#allocation3] sm:$0xff] %v1059
    %1136 = vst [vmem:[#allocation3 + $0x20] sm:$0xff] %v1132
    %1137 = vmatprep.subr.mxu0 0.0
    %1138 = vmatpush1.xpose.msra.mxu0 %v573
    %1139 = vmatprep.subr.mxu0 0.0
    %1140 = vmatpush1.xpose.msra.mxu0 0.0
    %1141 = vmatprep.subr.mxu0 0.0
    %1142 = vmatpush1.xpose.msra.mxu0 0.0
    %1143 = vmatprep.subr.mxu0 0.0
    %1144 = vmatpush1.xpose.msra.mxu0 0.0
    %1145 = vmatprep.subr.mxu0 0.0
    %1146 = vmatpush1.xpose.msra.mxu0 0.0
    %1147 = vmatprep.subr.mxu0 0.0
    %1148 = vmatpush1.xpose.msra.mxu0 0.0
    %1149 = vmatprep.subr.mxu0 0.0
    %1150 = vmatpush1.xpose.msra.mxu0 0.0
    %1151 = vmatprep.subr.mxu0 0.0
    %1152 = vmatpush1.xpose.msra.mxu0 0.0
    %1153 = vmatprep.subr.mxu0 0.0
    %1154 = vmatpush1.xpose.msra.mxu0 0.0
    %1155 = vmatprep.subr.mxu0 0.0
    %1156 = vmatpush1.xpose.msra.mxu0 0.0
    %1157 = vmatprep.subr.mxu0 0.0
    %1158 = vmatpush1.xpose.msra.mxu0 0.0
    %1159 = vmatprep.subr.mxu0 0.0
    %1160 = vmatpush1.xpose.msra.mxu0 0.0
    %1161 = vmatprep.subr.mxu0 0.0
    %1162 = vmatpush1.xpose.msra.mxu0 0.0
    %1163 = vmatprep.subr.mxu0 0.0
    %1164 = vmatpush1.xpose.msra.mxu0 0.0
    %1165 = vmatprep.subr.mxu0 0.0
    %1166 = vmatpush1.xpose.msra.mxu0 0.0
    %1167 = vmatprep.subr.mxu0 0.0
    %1168 = vmatpush1.xpose.msra.mxu0 0.0
    %1169 = vmatprep.subr.mxu0 0.0
    %1170 = vmatpush1.xpose.msra.mxu0 0.0
    %1171 = vmatprep.subr.mxu0 0.0
    %1172 = vmatpush1.xpose.msra.mxu0 0.0
    %1173 = vmatprep.subr.mxu0 0.0
    %1174 = vmatpush1.xpose.msra.mxu0 0.0
    %1175 = vmatprep.subr.mxu0 0.0
    %1176 = vmatpush1.xpose.msra.mxu0 0.0
    %1177 = vmatprep.subr.mxu0 0.0
    %1178 = vmatpush1.xpose.msra.mxu0 0.0
    %1179 = vmatprep.subr.mxu0 0.0
    %1180 = vmatpush1.xpose.msra.mxu0 0.0
    %1181 = vmatprep.subr.mxu0 0.0
    %1182 = vmatpush1.xpose.msra.mxu0 0.0
    %1183 = vmatprep.subr.mxu0 0.0
    %1184 = vmatpush1.xpose.msra.mxu0 0.0
    %1185 = vmatprep.subr.mxu0 0.0
    %1186 = vmatpush1.xpose.msra.mxu0 0.0
    %1187 = vmatprep.subr.mxu0 0.0
    %1188 = vmatpush1.xpose.msra.mxu0 0.0
    %1189 = vmatprep.subr.mxu0 0.0
    %1190 = vmatpush1.xpose.msra.mxu0 0.0
    %1191 = vmatprep.subr.mxu0 0.0
    %1192 = vmatpush1.xpose.msra.mxu0 0.0
    %1193 = vmatprep.subr.mxu0 0.0
    %1194 = vmatpush1.xpose.msra.mxu0 0.0
    %1195 = vmatprep.subr.mxu0 0.0
    %1196 = vmatpush1.xpose.msra.mxu0 0.0
    %1197 = vmatprep.subr.mxu0 0.0
    %1198 = vmatpush1.xpose.msra.mxu0 0.0
    %1199 = vmatprep.subr.mxu0 0.0
    %1200 = vmatpush1.xpose.msra.mxu0 0.0
    %1201 = vmatprep.mubr.f32.mxu0 0.0
    %1202 = vmatmul.mubr.f32.gmra.mrb[0].mxu0 %v419
    %v1203 = vpop.f32.mrb[0].mxu0
    %v1204 = vadd.f32 %v819, %v1203
    %v1205 = vpop.f32.mrb[0].mxu0
    %1206 = vdwg.mxu0
    %1207 = vmatprep.subr.mxu0 0.0
    %1208 = vmatpush1.xpose.msra.mxu0 %v579
    %1209 = vmatprep.subr.mxu0 0.0
    %1210 = vmatpush1.xpose.msra.mxu0 0.0
    %1211 = vmatprep.subr.mxu0 0.0
    %1212 = vmatpush1.xpose.msra.mxu0 0.0
    %1213 = vmatprep.subr.mxu0 0.0
    %1214 = vmatpush1.xpose.msra.mxu0 0.0
    %1215 = vmatprep.subr.mxu0 0.0
    %1216 = vmatpush1.xpose.msra.mxu0 0.0
    %1217 = vmatprep.subr.mxu0 0.0
    %1218 = vmatpush1.xpose.msra.mxu0 0.0
    %1219 = vmatprep.subr.mxu0 0.0
    %1220 = vmatpush1.xpose.msra.mxu0 0.0
    %1221 = vmatprep.subr.mxu0 0.0
    %1222 = vmatpush1.xpose.msra.mxu0 0.0
    %1223 = vmatprep.subr.mxu0 0.0
    %1224 = vmatpush1.xpose.msra.mxu0 0.0
    %1225 = vmatprep.subr.mxu0 0.0
    %1226 = vmatpush1.xpose.msra.mxu0 0.0
    %1227 = vmatprep.subr.mxu0 0.0
    %1228 = vmatpush1.xpose.msra.mxu0 0.0
    %1229 = vmatprep.subr.mxu0 0.0
    %1230 = vmatpush1.xpose.msra.mxu0 0.0
    %1231 = vmatprep.subr.mxu0 0.0
    %1232 = vmatpush1.xpose.msra.mxu0 0.0
    %1233 = vmatprep.subr.mxu0 0.0
    %1234 = vmatpush1.xpose.msra.mxu0 0.0
    %1235 = vmatprep.subr.mxu0 0.0
    %1236 = vmatpush1.xpose.msra.mxu0 0.0
    %1237 = vmatprep.subr.mxu0 0.0
    %1238 = vmatpush1.xpose.msra.mxu0 0.0
    %1239 = vmatprep.subr.mxu0 0.0
    %1240 = vmatpush1.xpose.msra.mxu0 0.0
    %1241 = vmatprep.subr.mxu0 0.0
    %1242 = vmatpush1.xpose.msra.mxu0 0.0
    %1243 = vmatprep.subr.mxu0 0.0
    %1244 = vmatpush1.xpose.msra.mxu0 0.0
    %1245 = vmatprep.subr.mxu0 0.0
    %1246 = vmatpush1.xpose.msra.mxu0 0.0
    %1247 = vmatprep.subr.mxu0 0.0
    %1248 = vmatpush1.xpose.msra.mxu0 0.0
    %1249 = vmatprep.subr.mxu0 0.0
    %1250 = vmatpush1.xpose.msra.mxu0 0.0
    %1251 = vmatprep.subr.mxu0 0.0
    %1252 = vmatpush1.xpose.msra.mxu0 0.0
    %1253 = vmatprep.subr.mxu0 0.0
    %1254 = vmatpush1.xpose.msra.mxu0 0.0
    %1255 = vmatprep.subr.mxu0 0.0
    %1256 = vmatpush1.xpose.msra.mxu0 0.0
    %1257 = vmatprep.subr.mxu0 0.0
    %1258 = vmatpush1.xpose.msra.mxu0 0.0
    %1259 = vmatprep.subr.mxu0 0.0
    %1260 = vmatpush1.xpose.msra.mxu0 0.0
    %1261 = vmatprep.subr.mxu0 0.0
    %1262 = vmatpush1.xpose.msra.mxu0 0.0
    %1263 = vmatprep.subr.mxu0 0.0
    %1264 = vmatpush1.xpose.msra.mxu0 0.0
    %1265 = vmatprep.subr.mxu0 0.0
    %1266 = vmatpush1.xpose.msra.mxu0 0.0
    %1267 = vmatprep.subr.mxu0 0.0
    %1268 = vmatpush1.xpose.msra.mxu0 0.0
    %1269 = vmatprep.subr.mxu0 0.0
    %1270 = vmatpush1.xpose.msra.mxu0 0.0
    %1271 = vmatprep.mubr.f32.mxu0 0.0
    %1272 = vmatmul.mubr.f32.gmra.mrb[0].mxu0 %v425
    %v1273 = vpop.f32.mrb[0].mxu0
    %v1274 = vadd.f32 %v823, %v1273
    %v1275 = vpop.f32.mrb[0].mxu0
    %1276 = vdwg.mxu0
    %v1277 = vsel %vm966, %v1204, -inf
    %1278 = vmax.xlane.f32.xlu0 %v1277
    %v1279 = vpop.xlane.xlu0 %1278
    %v1280 = vsel %vm966, %v1274, -inf
    %1281 = vmax.xlane.f32.xlu0 %v1280
    %v1282 = vpop.xlane.xlu0 %1281
    %v1283 = vsub.f32 %v1204, %v1279
    %v1284 = vsub.f32 %v1274, %v1282
    %v1285 = vmul.f32 %v1283, 1.442695
    %v1286 = vpow.pop %v1285
    %v1287 = vmul.f32 %v1284, 1.442695
    %v1288 = vpow.pop %v1287
    %v1289 = vsel %vm966, %v1286, 0.0
    %1290 = vadd.xlane.f32.xlu0 %v1289
    %v1291 = vpop.xlane.xlu0 %1290
    %v1292 = vsel %vm966, %v1288, 0.0
    %1293 = vadd.xlane.f32.xlu0 %v1292
    %v1294 = vpop.xlane.xlu0 %1293
    %v1295 = vrcp.pop %v1291
    %v1296 = vrcp.pop %v1294
    %v1297 = vmul.f32 %v1286, %v1295
    %v1298 = vmul.f32 %v1288, %v1296
    %v1300 = vsel %vm966, %v1297, 0
    %1302 = vmatprep.subr.mxu0 0.0
    %1303 = vmatpush1.msra.mxu0 %v727
    %1304 = vmatprep.subr.mxu0 0.0
    %1305 = vmatpush1.msra.mxu0 0.0
    %1306 = vmatprep.subr.mxu0 0.0
    %1307 = vmatpush1.msra.mxu0 0.0
    %1308 = vmatprep.subr.mxu0 0.0
    %1309 = vmatpush1.msra.mxu0 0.0
    %1310 = vmatprep.subr.mxu0 0.0
    %1311 = vmatpush1.msra.mxu0 0.0
    %1312 = vmatprep.subr.mxu0 0.0
    %1313 = vmatpush1.msra.mxu0 0.0
    %1314 = vmatprep.subr.mxu0 0.0
    %1315 = vmatpush1.msra.mxu0 0.0
    %1316 = vmatprep.subr.mxu0 0.0
    %1317 = vmatpush1.msra.mxu0 0.0
    %1318 = vmatprep.subr.mxu0 0.0
    %1319 = vmatpush1.msra.mxu0 0.0
    %1320 = vmatprep.subr.mxu0 0.0
    %1321 = vmatpush1.msra.mxu0 0.0
    %1322 = vmatprep.subr.mxu0 0.0
    %1323 = vmatpush1.msra.mxu0 0.0
    %1324 = vmatprep.subr.mxu0 0.0
    %1325 = vmatpush1.msra.mxu0 0.0
    %1326 = vmatprep.subr.mxu0 0.0
    %1327 = vmatpush1.msra.mxu0 0.0
    %1328 = vmatprep.subr.mxu0 0.0
    %1329 = vmatpush1.msra.mxu0 0.0
    %1330 = vmatprep.subr.mxu0 0.0
    %1331 = vmatpush1.msra.mxu0 0.0
    %1332 = vmatprep.subr.mxu0 0.0
    %1333 = vmatpush1.msra.mxu0 0.0
    %1334 = vmatprep.subr.mxu0 0.0
    %1335 = vmatpush1.msra.mxu0 0.0
    %1336 = vmatprep.subr.mxu0 0.0
    %1337 = vmatpush1.msra.mxu0 0.0
    %1338 = vmatprep.subr.mxu0 0.0
    %1339 = vmatpush1.msra.mxu0 0.0
    %1340 = vmatprep.subr.mxu0 0.0
    %1341 = vmatpush1.msra.mxu0 0.0
    %1342 = vmatprep.subr.mxu0 0.0
    %1343 = vmatpush1.msra.mxu0 0.0
    %1344 = vmatprep.subr.mxu0 0.0
    %1345 = vmatpush1.msra.mxu0 0.0
    %1346 = vmatprep.subr.mxu0 0.0
    %1347 = vmatpush1.msra.mxu0 0.0
    %1348 = vmatprep.subr.mxu0 0.0
    %1349 = vmatpush1.msra.mxu0 0.0
    %1350 = vmatprep.subr.mxu0 0.0
    %1351 = vmatpush1.msra.mxu0 0.0
    %1352 = vmatprep.subr.mxu0 0.0
    %1353 = vmatpush1.msra.mxu0 0.0
    %1354 = vmatprep.subr.mxu0 0.0
    %1355 = vmatpush1.msra.mxu0 0.0
    %1356 = vmatprep.subr.mxu0 0.0
    %1357 = vmatpush1.msra.mxu0 0.0
    %1358 = vmatprep.subr.mxu0 0.0
    %1359 = vmatpush1.msra.mxu0 0.0
    %1360 = vmatprep.subr.mxu0 0.0
    %1361 = vmatpush1.msra.mxu0 0.0
    %1362 = vmatprep.subr.mxu0 0.0
    %1363 = vmatpush1.msra.mxu0 0.0
    %1364 = vmatprep.subr.mxu0 0.0
    %1365 = vmatpush1.msra.mxu0 0.0
    %1366 = vmatprep.mubr.f32.mxu0 0.0
    %1367 = vmatmul.mubr.f32.gmra.mrb[0].mxu0 %v1300
    %v1368 = vpop.f32.mrb[0].mxu0
    %v1369 = vadd.f32 0.0, %v1368
    %v1370 = vpop.f32.mrb[0].mxu0
    %1371 = vdwg.mxu0
    %v1373 = vsel %vm966, %v1298, 0
    %1375 = vmatprep.subr.mxu0 0.0
    %1376 = vmatpush1.msra.mxu0 %v733
    %1377 = vmatprep.subr.mxu0 0.0
    %1378 = vmatpush1.msra.mxu0 0.0
    %1379 = vmatprep.subr.mxu0 0.0
    %1380 = vmatpush1.msra.mxu0 0.0
    %1381 = vmatprep.subr.mxu0 0.0
    %1382 = vmatpush1.msra.mxu0 0.0
    %1383 = vmatprep.subr.mxu0 0.0
    %1384 = vmatpush1.msra.mxu0 0.0
    %1385 = vmatprep.subr.mxu0 0.0
    %1386 = vmatpush1.msra.mxu0 0.0
    %1387 = vmatprep.subr.mxu0 0.0
    %1388 = vmatpush1.msra.mxu0 0.0
    %1389 = vmatprep.subr.mxu0 0.0
    %1390 = vmatpush1.msra.mxu0 0.0
    %1391 = vmatprep.subr.mxu0 0.0
    %1392 = vmatpush1.msra.mxu0 0.0
    %1393 = vmatprep.subr.mxu0 0.0
    %1394 = vmatpush1.msra.mxu0 0.0
    %1395 = vmatprep.subr.mxu0 0.0
    %1396 = vmatpush1.msra.mxu0 0.0
    %1397 = vmatprep.subr.mxu0 0.0
    %1398 = vmatpush1.msra.mxu0 0.0
    %1399 = vmatprep.subr.mxu0 0.0
    %1400 = vmatpush1.msra.mxu0 0.0
    %1401 = vmatprep.subr.mxu0 0.0
    %1402 = vmatpush1.msra.mxu0 0.0
    %1403 = vmatprep.subr.mxu0 0.0
    %1404 = vmatpush1.msra.mxu0 0.0
    %1405 = vmatprep.subr.mxu0 0.0
    %1406 = vmatpush1.msra.mxu0 0.0
    %1407 = vmatprep.subr.mxu0 0.0
    %1408 = vmatpush1.msra.mxu0 0.0
    %1409 = vmatprep.subr.mxu0 0.0
    %1410 = vmatpush1.msra.mxu0 0.0
    %1411 = vmatprep.subr.mxu0 0.0
    %1412 = vmatpush1.msra.mxu0 0.0
    %1413 = vmatprep.subr.mxu0 0.0
    %1414 = vmatpush1.msra.mxu0 0.0
    %1415 = vmatprep.subr.mxu0 0.0
    %1416 = vmatpush1.msra.mxu0 0.0
    %1417 = vmatprep.subr.mxu0 0.0
    %1418 = vmatpush1.msra.mxu0 0.0
    %1419 = vmatprep.subr.mxu0 0.0
    %1420 = vmatpush1.msra.mxu0 0.0
    %1421 = vmatprep.subr.mxu0 0.0
    %1422 = vmatpush1.msra.mxu0 0.0
    %1423 = vmatprep.subr.mxu0 0.0
    %1424 = vmatpush1.msra.mxu0 0.0
    %1425 = vmatprep.subr.mxu0 0.0
    %1426 = vmatpush1.msra.mxu0 0.0
    %1427 = vmatprep.subr.mxu0 0.0
    %1428 = vmatpush1.msra.mxu0 0.0
    %1429 = vmatprep.subr.mxu0 0.0
    %1430 = vmatpush1.msra.mxu0 0.0
    %1431 = vmatprep.subr.mxu0 0.0
    %1432 = vmatpush1.msra.mxu0 0.0
    %1433 = vmatprep.subr.mxu0 0.0
    %1434 = vmatpush1.msra.mxu0 0.0
    %1435 = vmatprep.subr.mxu0 0.0
    %1436 = vmatpush1.msra.mxu0 0.0
    %1437 = vmatprep.subr.mxu0 0.0
    %1438 = vmatpush1.msra.mxu0 0.0
    %1439 = vmatprep.mubr.f32.mxu0 0.0
    %1440 = vmatmul.mubr.f32.gmra.mrb[0].mxu0 %v1373
    %v1441 = vpop.f32.mrb[0].mxu0
    %v1442 = vadd.f32 0.0, %v1441
    %v1443 = vpop.f32.mrb[0].mxu0
    %1444 = vdwg.mxu0
    %1445 = vst [vmem:[#allocation3 + $0x8] sm:$0xff] %v1369
    %1446 = vst [vmem:[#allocation3 + $0x28] sm:$0xff] %v1442
    %1447 = vmatprep.subr.mxu0 0.0
    %1448 = vmatpush1.xpose.msra.mxu0 %v648
    %1449 = vmatprep.subr.mxu0 0.0
    %1450 = vmatpush1.xpose.msra.mxu0 0.0
    %1451 = vmatprep.subr.mxu0 0.0
    %1452 = vmatpush1.xpose.msra.mxu0 0.0
    %1453 = vmatprep.subr.mxu0 0.0
    %1454 = vmatpush1.xpose.msra.mxu0 0.0
    %1455 = vmatprep.subr.mxu0 0.0
    %1456 = vmatpush1.xpose.msra.mxu0 0.0
    %1457 = vmatprep.subr.mxu0 0.0
    %1458 = vmatpush1.xpose.msra.mxu0 0.0
    %1459 = vmatprep.subr.mxu0 0.0
    %1460 = vmatpush1.xpose.msra.mxu0 0.0
    %1461 = vmatprep.subr.mxu0 0.0
    %1462 = vmatpush1.xpose.msra.mxu0 0.0
    %1463 = vmatprep.subr.mxu0 0.0
    %1464 = vmatpush1.xpose.msra.mxu0 0.0
    %1465 = vmatprep.subr.mxu0 0.0
    %1466 = vmatpush1.xpose.msra.mxu0 0.0
    %1467 = vmatprep.subr.mxu0 0.0
    %1468 = vmatpush1.xpose.msra.mxu0 0.0
    %1469 = vmatprep.subr.mxu0 0.0
    %1470 = vmatpush1.xpose.msra.mxu0 0.0
    %1471 = vmatprep.subr.mxu0 0.0
    %1472 = vmatpush1.xpose.msra.mxu0 0.0
    %1473 = vmatprep.subr.mxu0 0.0
    %1474 = vmatpush1.xpose.msra.mxu0 0.0
    %1475 = vmatprep.subr.mxu0 0.0
    %1476 = vmatpush1.xpose.msra.mxu0 0.0
    %1477 = vmatprep.subr.mxu0 0.0
    %1478 = vmatpush1.xpose.msra.mxu0 0.0
    %1479 = vmatprep.subr.mxu0 0.0
    %1480 = vmatpush1.xpose.msra.mxu0 0.0
    %1481 = vmatprep.subr.mxu0 0.0
    %1482 = vmatpush1.xpose.msra.mxu0 0.0
    %1483 = vmatprep.subr.mxu0 0.0
    %1484 = vmatpush1.xpose.msra.mxu0 0.0
    %1485 = vmatprep.subr.mxu0 0.0
    %1486 = vmatpush1.xpose.msra.mxu0 0.0
    %1487 = vmatprep.subr.mxu0 0.0
    %1488 = vmatpush1.xpose.msra.mxu0 0.0
    %1489 = vmatprep.subr.mxu0 0.0
    %1490 = vmatpush1.xpose.msra.mxu0 0.0
    %1491 = vmatprep.subr.mxu0 0.0
    %1492 = vmatpush1.xpose.msra.mxu0 0.0
    %1493 = vmatprep.subr.mxu0 0.0
    %1494 = vmatpush1.xpose.msra.mxu0 0.0
    %1495 = vmatprep.subr.mxu0 0.0
    %1496 = vmatpush1.xpose.msra.mxu0 0.0
    %1497 = vmatprep.subr.mxu0 0.0
    %1498 = vmatpush1.xpose.msra.mxu0 0.0
    %1499 = vmatprep.subr.mxu0 0.0
    %1500 = vmatpush1.xpose.msra.mxu0 0.0
    %1501 = vmatprep.subr.mxu0 0.0
    %1502 = vmatpush1.xpose.msra.mxu0 0.0
    %1503 = vmatprep.subr.mxu0 0.0
    %1504 = vmatpush1.xpose.msra.mxu0 0.0
    %1505 = vmatprep.subr.mxu0 0.0
    %1506 = vmatpush1.xpose.msra.mxu0 0.0
    %1507 = vmatprep.subr.mxu0 0.0
    %1508 = vmatpush1.xpose.msra.mxu0 0.0
    %1509 = vmatprep.subr.mxu0 0.0
    %1510 = vmatpush1.xpose.msra.mxu0 0.0
    %1511 = vmatprep.mubr.f32.mxu0 0.0
    %1512 = vmatmul.mubr.f32.gmra.mrb[0].mxu0 %v494
    %v1513 = vpop.f32.mrb[0].mxu0
    %v1514 = vadd.f32 %v819, %v1513
    %v1515 = vpop.f32.mrb[0].mxu0
    %1516 = vdwg.mxu0
    %1517 = vmatprep.subr.mxu0 0.0
    %1518 = vmatpush1.xpose.msra.mxu0 %v654
    %1519 = vmatprep.subr.mxu0 0.0
    %1520 = vmatpush1.xpose.msra.mxu0 0.0
    %1521 = vmatprep.subr.mxu0 0.0
    %1522 = vmatpush1.xpose.msra.mxu0 0.0
    %1523 = vmatprep.subr.mxu0 0.0
    %1524 = vmatpush1.xpose.msra.mxu0 0.0
    %1525 = vmatprep.subr.mxu0 0.0
    %1526 = vmatpush1.xpose.msra.mxu0 0.0
    %1527 = vmatprep.subr.mxu0 0.0
    %1528 = vmatpush1.xpose.msra.mxu0 0.0
    %1529 = vmatprep.subr.mxu0 0.0
    %1530 = vmatpush1.xpose.msra.mxu0 0.0
    %1531 = vmatprep.subr.mxu0 0.0
    %1532 = vmatpush1.xpose.msra.mxu0 0.0
    %1533 = vmatprep.subr.mxu0 0.0
    %1534 = vmatpush1.xpose.msra.mxu0 0.0
    %1535 = vmatprep.subr.mxu0 0.0
    %1536 = vmatpush1.xpose.msra.mxu0 0.0
    %1537 = vmatprep.subr.mxu0 0.0
    %1538 = vmatpush1.xpose.msra.mxu0 0.0
    %1539 = vmatprep.subr.mxu0 0.0
    %1540 = vmatpush1.xpose.msra.mxu0 0.0
    %1541 = vmatprep.subr.mxu0 0.0
    %1542 = vmatpush1.xpose.msra.mxu0 0.0
    %1543 = vmatprep.subr.mxu0 0.0
    %1544 = vmatpush1.xpose.msra.mxu0 0.0
    %1545 = vmatprep.subr.mxu0 0.0
    %1546 = vmatpush1.xpose.msra.mxu0 0.0
    %1547 = vmatprep.subr.mxu0 0.0
    %1548 = vmatpush1.xpose.msra.mxu0 0.0
    %1549 = vmatprep.subr.mxu0 0.0
    %1550 = vmatpush1.xpose.msra.mxu0 0.0
    %1551 = vmatprep.subr.mxu0 0.0
    %1552 = vmatpush1.xpose.msra.mxu0 0.0
    %1553 = vmatprep.subr.mxu0 0.0
    %1554 = vmatpush1.xpose.msra.mxu0 0.0
    %1555 = vmatprep.subr.mxu0 0.0
    %1556 = vmatpush1.xpose.msra.mxu0 0.0
    %1557 = vmatprep.subr.mxu0 0.0
    %1558 = vmatpush1.xpose.msra.mxu0 0.0
    %1559 = vmatprep.subr.mxu0 0.0
    %1560 = vmatpush1.xpose.msra.mxu0 0.0
    %1561 = vmatprep.subr.mxu0 0.0
    %1562 = vmatpush1.xpose.msra.mxu0 0.0
    %1563 = vmatprep.subr.mxu0 0.0
    %1564 = vmatpush1.xpose.msra.mxu0 0.0
    %1565 = vmatprep.subr.mxu0 0.0
    %1566 = vmatpush1.xpose.msra.mxu0 0.0
    %1567 = vmatprep.subr.mxu0 0.0
    %1568 = vmatpush1.xpose.msra.mxu0 0.0
    %1569 = vmatprep.subr.mxu0 0.0
    %1570 = vmatpush1.xpose.msra.mxu0 0.0
    %1571 = vmatprep.subr.mxu0 0.0
    %1572 = vmatpush1.xpose.msra.mxu0 0.0
    %1573 = vmatprep.subr.mxu0 0.0
    %1574 = vmatpush1.xpose.msra.mxu0 0.0
    %1575 = vmatprep.subr.mxu0 0.0
    %1576 = vmatpush1.xpose.msra.mxu0 0.0
    %1577 = vmatprep.subr.mxu0 0.0
    %1578 = vmatpush1.xpose.msra.mxu0 0.0
    %1579 = vmatprep.subr.mxu0 0.0
    %1580 = vmatpush1.xpose.msra.mxu0 0.0
    %1581 = vmatprep.mubr.f32.mxu0 0.0
    %1582 = vmatmul.mubr.f32.gmra.mrb[0].mxu0 %v500
    %v1583 = vpop.f32.mrb[0].mxu0
    %v1584 = vadd.f32 %v823, %v1583
    %v1585 = vpop.f32.mrb[0].mxu0
    %1586 = vdwg.mxu0
    %v1587 = vsel %vm966, %v1514, -inf
    %1588 = vmax.xlane.f32.xlu0 %v1587
    %v1589 = vpop.xlane.xlu0 %1588
    %v1590 = vsel %vm966, %v1584, -inf
    %1591 = vmax.xlane.f32.xlu0 %v1590
    %v1592 = vpop.xlane.xlu0 %1591
    %v1593 = vsub.f32 %v1514, %v1589
    %v1594 = vsub.f32 %v1584, %v1592
    %v1595 = vmul.f32 %v1593, 1.442695
    %v1596 = vpow.pop %v1595
    %v1597 = vmul.f32 %v1594, 1.442695
    %v1598 = vpow.pop %v1597
    %v1599 = vsel %vm966, %v1596, 0.0
    %1600 = vadd.xlane.f32.xlu0 %v1599
    %v1601 = vpop.xlane.xlu0 %1600
    %v1602 = vsel %vm966, %v1598, 0.0
    %1603 = vadd.xlane.f32.xlu0 %v1602
    %v1604 = vpop.xlane.xlu0 %1603
    %v1605 = vrcp.pop %v1601
    %v1606 = vrcp.pop %v1604
    %v1607 = vmul.f32 %v1596, %v1605
    %v1608 = vmul.f32 %v1598, %v1606
    %v1610 = vsel %vm966, %v1607, 0
    %1612 = vmatprep.subr.mxu0 0.0
    %1613 = vmatpush1.msra.mxu0 %v802
    %1614 = vmatprep.subr.mxu0 0.0
    %1615 = vmatpush1.msra.mxu0 0.0
    %1616 = vmatprep.subr.mxu0 0.0
    %1617 = vmatpush1.msra.mxu0 0.0
    %1618 = vmatprep.subr.mxu0 0.0
    %1619 = vmatpush1.msra.mxu0 0.0
    %1620 = vmatprep.subr.mxu0 0.0
    %1621 = vmatpush1.msra.mxu0 0.0
    %1622 = vmatprep.subr.mxu0 0.0
    %1623 = vmatpush1.msra.mxu0 0.0
    %1624 = vmatprep.subr.mxu0 0.0
    %1625 = vmatpush1.msra.mxu0 0.0
    %1626 = vmatprep.subr.mxu0 0.0
    %1627 = vmatpush1.msra.mxu0 0.0
    %1628 = vmatprep.subr.mxu0 0.0
    %1629 = vmatpush1.msra.mxu0 0.0
    %1630 = vmatprep.subr.mxu0 0.0
    %1631 = vmatpush1.msra.mxu0 0.0
    %1632 = vmatprep.subr.mxu0 0.0
    %1633 = vmatpush1.msra.mxu0 0.0
    %1634 = vmatprep.subr.mxu0 0.0
    %1635 = vmatpush1.msra.mxu0 0.0
    %1636 = vmatprep.subr.mxu0 0.0
    %1637 = vmatpush1.msra.mxu0 0.0
    %1638 = vmatprep.subr.mxu0 0.0
    %1639 = vmatpush1.msra.mxu0 0.0
    %1640 = vmatprep.subr.mxu0 0.0
    %1641 = vmatpush1.msra.mxu0 0.0
    %1642 = vmatprep.subr.mxu0 0.0
    %1643 = vmatpush1.msra.mxu0 0.0
    %1644 = vmatprep.subr.mxu0 0.0
    %1645 = vmatpush1.msra.mxu0 0.0
    %1646 = vmatprep.subr.mxu0 0.0
    %1647 = vmatpush1.msra.mxu0 0.0
    %1648 = vmatprep.subr.mxu0 0.0
    %1649 = vmatpush1.msra.mxu0 0.0
    %1650 = vmatprep.subr.mxu0 0.0
    %1651 = vmatpush1.msra.mxu0 0.0
    %1652 = vmatprep.subr.mxu0 0.0
    %1653 = vmatpush1.msra.mxu0 0.0
    %1654 = vmatprep.subr.mxu0 0.0
    %1655 = vmatpush1.msra.mxu0 0.0
    %1656 = vmatprep.subr.mxu0 0.0
    %1657 = vmatpush1.msra.mxu0 0.0
    %1658 = vmatprep.subr.mxu0 0.0
    %1659 = vmatpush1.msra.mxu0 0.0
    %1660 = vmatprep.subr.mxu0 0.0
    %1661 = vmatpush1.msra.mxu0 0.0
    %1662 = vmatprep.subr.mxu0 0.0
    %1663 = vmatpush1.msra.mxu0 0.0
    %1664 = vmatprep.subr.mxu0 0.0
    %1665 = vmatpush1.msra.mxu0 0.0
    %1666 = vmatprep.subr.mxu0 0.0
    %1667 = vmatpush1.msra.mxu0 0.0
    %1668 = vmatprep.subr.mxu0 0.0
    %1669 = vmatpush1.msra.mxu0 0.0
    %1670 = vmatprep.subr.mxu0 0.0
    %1671 = vmatpush1.msra.mxu0 0.0
    %1672 = vmatprep.subr.mxu0 0.0
    %1673 = vmatpush1.msra.mxu0 0.0
    %1674 = vmatprep.subr.mxu0 0.0
    %1675 = vmatpush1.msra.mxu0 0.0
    %1676 = vmatprep.mubr.f32.mxu0 0.0
    %1677 = vmatmul.mubr.f32.gmra.mrb[0].mxu0 %v1610
    %v1678 = vpop.f32.mrb[0].mxu0
    %v1679 = vadd.f32 0.0, %v1678
    %v1680 = vpop.f32.mrb[0].mxu0
    %1681 = vdwg.mxu0
    %v1683 = vsel %vm966, %v1608, 0
    %1685 = vmatprep.subr.mxu0 0.0
    %1686 = vmatpush1.msra.mxu0 %v808
    %1687 = vmatprep.subr.mxu0 0.0
    %1688 = vmatpush1.msra.mxu0 0.0
    %1689 = vmatprep.subr.mxu0 0.0
    %1690 = vmatpush1.msra.mxu0 0.0
    %1691 = vmatprep.subr.mxu0 0.0
    %1692 = vmatpush1.msra.mxu0 0.0
    %1693 = vmatprep.subr.mxu0 0.0
    %1694 = vmatpush1.msra.mxu0 0.0
    %1695 = vmatprep.subr.mxu0 0.0
    %1696 = vmatpush1.msra.mxu0 0.0
    %1697 = vmatprep.subr.mxu0 0.0
    %1698 = vmatpush1.msra.mxu0 0.0
    %1699 = vmatprep.subr.mxu0 0.0
    %1700 = vmatpush1.msra.mxu0 0.0
    %1701 = vmatprep.subr.mxu0 0.0
    %1702 = vmatpush1.msra.mxu0 0.0
    %1703 = vmatprep.subr.mxu0 0.0
    %1704 = vmatpush1.msra.mxu0 0.0
    %1705 = vmatprep.subr.mxu0 0.0
    %1706 = vmatpush1.msra.mxu0 0.0
    %1707 = vmatprep.subr.mxu0 0.0
    %1708 = vmatpush1.msra.mxu0 0.0
    %1709 = vmatprep.subr.mxu0 0.0
    %1710 = vmatpush1.msra.mxu0 0.0
    %1711 = vmatprep.subr.mxu0 0.0
    %1712 = vmatpush1.msra.mxu0 0.0
    %1713 = vmatprep.subr.mxu0 0.0
    %1714 = vmatpush1.msra.mxu0 0.0
    %1715 = vmatprep.subr.mxu0 0.0
    %1716 = vmatpush1.msra.mxu0 0.0
    %1717 = vmatprep.subr.mxu0 0.0
    %1718 = vmatpush1.msra.mxu0 0.0
    %1719 = vmatprep.subr.mxu0 0.0
    %1720 = vmatpush1.msra.mxu0 0.0
    %1721 = vmatprep.subr.mxu0 0.0
    %1722 = vmatpush1.msra.mxu0 0.0
    %1723 = vmatprep.subr.mxu0 0.0
    %1724 = vmatpush1.msra.mxu0 0.0
    %1725 = vmatprep.subr.mxu0 0.0
    %1726 = vmatpush1.msra.mxu0 0.0
    %1727 = vmatprep.subr.mxu0 0.0
    %1728 = vmatpush1.msra.mxu0 0.0
    %1729 = vmatprep.subr.mxu0 0.0
    %1730 = vmatpush1.msra.mxu0 0.0
    %1731 = vmatprep.subr.mxu0 0.0
    %1732 = vmatpush1.msra.mxu0 0.0
    %1733 = vmatprep.subr.mxu0 0.0
    %1734 = vmatpush1.msra.mxu0 0.0
    %1735 = vmatprep.subr.mxu0 0.0
    %1736 = vmatpush1.msra.mxu0 0.0
    %1737 = vmatprep.subr.mxu0 0.0
    %1738 = vmatpush1.msra.mxu0 0.0
    %1739 = vmatprep.subr.mxu0 0.0
    %1740 = vmatpush1.msra.mxu0 0.0
    %1741 = vmatprep.subr.mxu0 0.0
    %1742 = vmatpush1.msra.mxu0 0.0
    %1743 = vmatprep.subr.mxu0 0.0
    %1744 = vmatpush1.msra.mxu0 0.0
    %1745 = vmatprep.subr.mxu0 0.0
    %1746 = vmatpush1.msra.mxu0 0.0
    %1747 = vmatprep.subr.mxu0 0.0
    %1748 = vmatpush1.msra.mxu0 0.0
    %1749 = vmatprep.mubr.f32.mxu0 0.0
    %1750 = vmatmul.mubr.f32.gmra.mrb[0].mxu0 %v1683
    %v1751 = vpop.f32.mrb[0].mxu0
    %v1752 = vadd.f32 0.0, %v1751
    %v1753 = vpop.f32.mrb[0].mxu0
    %1754 = vdwg.mxu0
    %1755 = vst [vmem:[#allocation3 + $0x10] sm:$0xff] %v1679
    %1756 = vst [vmem:[#allocation3 + $0x30] sm:$0xff] %v1752
    %1757 = vmatprep.subr.mxu0 0.0
    %1758 = vmatpush1.xpose.msra.mxu0 %v650
    %1759 = vmatprep.subr.mxu0 0.0
    %1760 = vmatpush1.xpose.msra.mxu0 0.0
    %1761 = vmatprep.subr.mxu0 0.0
    %1762 = vmatpush1.xpose.msra.mxu0 0.0
    %1763 = vmatprep.subr.mxu0 0.0
    %1764 = vmatpush1.xpose.msra.mxu0 0.0
    %1765 = vmatprep.subr.mxu0 0.0
    %1766 = vmatpush1.xpose.msra.mxu0 0.0
    %1767 = vmatprep.subr.mxu0 0.0
    %1768 = vmatpush1.xpose.msra.mxu0 0.0
    %1769 = vmatprep.subr.mxu0 0.0
    %1770 = vmatpush1.xpose.msra.mxu0 0.0
    %1771 = vmatprep.subr.mxu0 0.0
    %1772 = vmatpush1.xpose.msra.mxu0 0.0
    %1773 = vmatprep.subr.mxu0 0.0
    %1774 = vmatpush1.xpose.msra.mxu0 0.0
    %1775 = vmatprep.subr.mxu0 0.0
    %1776 = vmatpush1.xpose.msra.mxu0 0.0
    %1777 = vmatprep.subr.mxu0 0.0
    %1778 = vmatpush1.xpose.msra.mxu0 0.0
    %1779 = vmatprep.subr.mxu0 0.0
    %1780 = vmatpush1.xpose.msra.mxu0 0.0
    %1781 = vmatprep.subr.mxu0 0.0
    %1782 = vmatpush1.xpose.msra.mxu0 0.0
    %1783 = vmatprep.subr.mxu0 0.0
    %1784 = vmatpush1.xpose.msra.mxu0 0.0
    %1785 = vmatprep.subr.mxu0 0.0
    %1786 = vmatpush1.xpose.msra.mxu0 0.0
    %1787 = vmatprep.subr.mxu0 0.0
    %1788 = vmatpush1.xpose.msra.mxu0 0.0
    %1789 = vmatprep.subr.mxu0 0.0
    %1790 = vmatpush1.xpose.msra.mxu0 0.0
    %1791 = vmatprep.subr.mxu0 0.0
    %1792 = vmatpush1.xpose.msra.mxu0 0.0
    %1793 = vmatprep.subr.mxu0 0.0
    %1794 = vmatpush1.xpose.msra.mxu0 0.0
    %1795 = vmatprep.subr.mxu0 0.0
    %1796 = vmatpush1.xpose.msra.mxu0 0.0
    %1797 = vmatprep.subr.mxu0 0.0
    %1798 = vmatpush1.xpose.msra.mxu0 0.0
    %1799 = vmatprep.subr.mxu0 0.0
    %1800 = vmatpush1.xpose.msra.mxu0 0.0
    %1801 = vmatprep.subr.mxu0 0.0
    %1802 = vmatpush1.xpose.msra.mxu0 0.0
    %1803 = vmatprep.subr.mxu0 0.0
    %1804 = vmatpush1.xpose.msra.mxu0 0.0
    %1805 = vmatprep.subr.mxu0 0.0
    %1806 = vmatpush1.xpose.msra.mxu0 0.0
    %1807 = vmatprep.subr.mxu0 0.0
    %1808 = vmatpush1.xpose.msra.mxu0 0.0
    %1809 = vmatprep.subr.mxu0 0.0
    %1810 = vmatpush1.xpose.msra.mxu0 0.0
    %1811 = vmatprep.subr.mxu0 0.0
    %1812 = vmatpush1.xpose.msra.mxu0 0.0
    %1813 = vmatprep.subr.mxu0 0.0
    %1814 = vmatpush1.xpose.msra.mxu0 0.0
    %1815 = vmatprep.subr.mxu0 0.0
    %1816 = vmatpush1.xpose.msra.mxu0 0.0
    %1817 = vmatprep.subr.mxu0 0.0
    %1818 = vmatpush1.xpose.msra.mxu0 0.0
    %1819 = vmatprep.subr.mxu0 0.0
    %1820 = vmatpush1.xpose.msra.mxu0 0.0
    %1821 = vmatprep.mubr.f32.mxu0 0.0
    %1822 = vmatmul.mubr.f32.gmra.mrb[0].mxu0 %v496
    %v1823 = vpop.f32.mrb[0].mxu0
    %v1824 = vadd.f32 %v819, %v1823
    %v1825 = vpop.f32.mrb[0].mxu0
    %1826 = vdwg.mxu0
    %1827 = vmatprep.subr.mxu0 0.0
    %1828 = vmatpush1.xpose.msra.mxu0 %v656
    %1829 = vmatprep.subr.mxu0 0.0
    %1830 = vmatpush1.xpose.msra.mxu0 0.0
    %1831 = vmatprep.subr.mxu0 0.0
    %1832 = vmatpush1.xpose.msra.mxu0 0.0
    %1833 = vmatprep.subr.mxu0 0.0
    %1834 = vmatpush1.xpose.msra.mxu0 0.0
    %1835 = vmatprep.subr.mxu0 0.0
    %1836 = vmatpush1.xpose.msra.mxu0 0.0
    %1837 = vmatprep.subr.mxu0 0.0
    %1838 = vmatpush1.xpose.msra.mxu0 0.0
    %1839 = vmatprep.subr.mxu0 0.0
    %1840 = vmatpush1.xpose.msra.mxu0 0.0
    %1841 = vmatprep.subr.mxu0 0.0
    %1842 = vmatpush1.xpose.msra.mxu0 0.0
    %1843 = vmatprep.subr.mxu0 0.0
    %1844 = vmatpush1.xpose.msra.mxu0 0.0
    %1845 = vmatprep.subr.mxu0 0.0
    %1846 = vmatpush1.xpose.msra.mxu0 0.0
    %1847 = vmatprep.subr.mxu0 0.0
    %1848 = vmatpush1.xpose.msra.mxu0 0.0
    %1849 = vmatprep.subr.mxu0 0.0
    %1850 = vmatpush1.xpose.msra.mxu0 0.0
    %1851 = vmatprep.subr.mxu0 0.0
    %1852 = vmatpush1.xpose.msra.mxu0 0.0
    %1853 = vmatprep.subr.mxu0 0.0
    %1854 = vmatpush1.xpose.msra.mxu0 0.0
    %1855 = vmatprep.subr.mxu0 0.0
    %1856 = vmatpush1.xpose.msra.mxu0 0.0
    %1857 = vmatprep.subr.mxu0 0.0
    %1858 = vmatpush1.xpose.msra.mxu0 0.0
    %1859 = vmatprep.subr.mxu0 0.0
    %1860 = vmatpush1.xpose.msra.mxu0 0.0
    %1861 = vmatprep.subr.mxu0 0.0
    %1862 = vmatpush1.xpose.msra.mxu0 0.0
    %1863 = vmatprep.subr.mxu0 0.0
    %1864 = vmatpush1.xpose.msra.mxu0 0.0
    %1865 = vmatprep.subr.mxu0 0.0
    %1866 = vmatpush1.xpose.msra.mxu0 0.0
    %1867 = vmatprep.subr.mxu0 0.0
    %1868 = vmatpush1.xpose.msra.mxu0 0.0
    %1869 = vmatprep.subr.mxu0 0.0
    %1870 = vmatpush1.xpose.msra.mxu0 0.0
    %1871 = vmatprep.subr.mxu0 0.0
    %1872 = vmatpush1.xpose.msra.mxu0 0.0
    %1873 = vmatprep.subr.mxu0 0.0
    %1874 = vmatpush1.xpose.msra.mxu0 0.0
    %1875 = vmatprep.subr.mxu0 0.0
    %1876 = vmatpush1.xpose.msra.mxu0 0.0
    %1877 = vmatprep.subr.mxu0 0.0
    %1878 = vmatpush1.xpose.msra.mxu0 0.0
    %1879 = vmatprep.subr.mxu0 0.0
    %1880 = vmatpush1.xpose.msra.mxu0 0.0
    %1881 = vmatprep.subr.mxu0 0.0
    %1882 = vmatpush1.xpose.msra.mxu0 0.0
    %1883 = vmatprep.subr.mxu0 0.0
    %1884 = vmatpush1.xpose.msra.mxu0 0.0
    %1885 = vmatprep.subr.mxu0 0.0
    %1886 = vmatpush1.xpose.msra.mxu0 0.0
    %1887 = vmatprep.subr.mxu0 0.0
    %1888 = vmatpush1.xpose.msra.mxu0 0.0
    %1889 = vmatprep.subr.mxu0 0.0
    %1890 = vmatpush1.xpose.msra.mxu0 0.0
    %1891 = vmatprep.mubr.f32.mxu0 0.0
    %1892 = vmatmul.mubr.f32.gmra.mrb[0].mxu0 %v502
    %v1893 = vpop.f32.mrb[0].mxu0
    %v1894 = vadd.f32 %v823, %v1893
    %v1895 = vpop.f32.mrb[0].mxu0
    %1896 = vdwg.mxu0
    %v1897 = vsel %vm966, %v1824, -inf
    %1898 = vmax.xlane.f32.xlu0 %v1897
    %v1899 = vpop.xlane.xlu0 %1898
    %v1900 = vsel %vm966, %v1894, -inf
    %1901 = vmax.xlane.f32.xlu0 %v1900
    %v1902 = vpop.xlane.xlu0 %1901
    %v1903 = vsub.f32 %v1824, %v1899
    %v1904 = vsub.f32 %v1894, %v1902
    %v1905 = vmul.f32 %v1903, 1.442695
    %v1906 = vpow.pop %v1905
    %v1907 = vmul.f32 %v1904, 1.442695
    %v1908 = vpow.pop %v1907
    %v1909 = vsel %vm966, %v1906, 0.0
    %1910 = vadd.xlane.f32.xlu0 %v1909
    %v1911 = vpop.xlane.xlu0 %1910
    %v1912 = vsel %vm966, %v1908, 0.0
    %1913 = vadd.xlane.f32.xlu0 %v1912
    %v1914 = vpop.xlane.xlu0 %1913
    %v1915 = vrcp.pop %v1911
    %v1916 = vrcp.pop %v1914
    %v1917 = vmul.f32 %v1906, %v1915
    %v1918 = vmul.f32 %v1908, %v1916
    %v1920 = vsel %vm966, %v1917, 0
    %1922 = vmatprep.subr.mxu0 0.0
    %1923 = vmatpush1.msra.mxu0 %v804
    %1924 = vmatprep.subr.mxu0 0.0
    %1925 = vmatpush1.msra.mxu0 0.0
    %1926 = vmatprep.subr.mxu0 0.0
    %1927 = vmatpush1.msra.mxu0 0.0
    %1928 = vmatprep.subr.mxu0 0.0
    %1929 = vmatpush1.msra.mxu0 0.0
    %1930 = vmatprep.subr.mxu0 0.0
    %1931 = vmatpush1.msra.mxu0 0.0
    %1932 = vmatprep.subr.mxu0 0.0
    %1933 = vmatpush1.msra.mxu0 0.0
    %1934 = vmatprep.subr.mxu0 0.0
    %1935 = vmatpush1.msra.mxu0 0.0
    %1936 = vmatprep.subr.mxu0 0.0
    %1937 = vmatpush1.msra.mxu0 0.0
    %1938 = vmatprep.subr.mxu0 0.0
    %1939 = vmatpush1.msra.mxu0 0.0
    %1940 = vmatprep.subr.mxu0 0.0
    %1941 = vmatpush1.msra.mxu0 0.0
    %1942 = vmatprep.subr.mxu0 0.0
    %1943 = vmatpush1.msra.mxu0 0.0
    %1944 = vmatprep.subr.mxu0 0.0
    %1945 = vmatpush1.msra.mxu0 0.0
    %1946 = vmatprep.subr.mxu0 0.0
    %1947 = vmatpush1.msra.mxu0 0.0
    %1948 = vmatprep.subr.mxu0 0.0
    %1949 = vmatpush1.msra.mxu0 0.0
    %1950 = vmatprep.subr.mxu0 0.0
    %1951 = vmatpush1.msra.mxu0 0.0
    %1952 = vmatprep.subr.mxu0 0.0
    %1953 = vmatpush1.msra.mxu0 0.0
    %1954 = vmatprep.subr.mxu0 0.0
    %1955 = vmatpush1.msra.mxu0 0.0
    %1956 = vmatprep.subr.mxu0 0.0
    %1957 = vmatpush1.msra.mxu0 0.0
    %1958 = vmatprep.subr.mxu0 0.0
    %1959 = vmatpush1.msra.mxu0 0.0
    %1960 = vmatprep.subr.mxu0 0.0
    %1961 = vmatpush1.msra.mxu0 0.0
    %1962 = vmatprep.subr.mxu0 0.0
    %1963 = vmatpush1.msra.mxu0 0.0
    %1964 = vmatprep.subr.mxu0 0.0
    %1965 = vmatpush1.msra.mxu0 0.0
    %1966 = vmatprep.subr.mxu0 0.0
    %1967 = vmatpush1.msra.mxu0 0.0
    %1968 = vmatprep.subr.mxu0 0.0
    %1969 = vmatpush1.msra.mxu0 0.0
    %1970 = vmatprep.subr.mxu0 0.0
    %1971 = vmatpush1.msra.mxu0 0.0
    %1972 = vmatprep.subr.mxu0 0.0
    %1973 = vmatpush1.msra.mxu0 0.0
    %1974 = vmatprep.subr.mxu0 0.0
    %1975 = vmatpush1.msra.mxu0 0.0
    %1976 = vmatprep.subr.mxu0 0.0
    %1977 = vmatpush1.msra.mxu0 0.0
    %1978 = vmatprep.subr.mxu0 0.0
    %1979 = vmatpush1.msra.mxu0 0.0
    %1980 = vmatprep.subr.mxu0 0.0
    %1981 = vmatpush1.msra.mxu0 0.0
    %1982 = vmatprep.subr.mxu0 0.0
    %1983 = vmatpush1.msra.mxu0 0.0
    %1984 = vmatprep.subr.mxu0 0.0
    %1985 = vmatpush1.msra.mxu0 0.0
    %1986 = vmatprep.mubr.f32.mxu0 0.0
    %1987 = vmatmul.mubr.f32.gmra.mrb[0].mxu0 %v1920
    %v1988 = vpop.f32.mrb[0].mxu0
    %v1989 = vadd.f32 0.0, %v1988
    %v1990 = vpop.f32.mrb[0].mxu0
    %1991 = vdwg.mxu0
    %v1993 = vsel %vm966, %v1918, 0
    %1995 = vmatprep.subr.mxu0 0.0
    %1996 = vmatpush1.msra.mxu0 %v810
    %1997 = vmatprep.subr.mxu0 0.0
    %1998 = vmatpush1.msra.mxu0 0.0
    %1999 = vmatprep.subr.mxu0 0.0
    %2000 = vmatpush1.msra.mxu0 0.0
    %2001 = vmatprep.subr.mxu0 0.0
    %2002 = vmatpush1.msra.mxu0 0.0
    %2003 = vmatprep.subr.mxu0 0.0
    %2004 = vmatpush1.msra.mxu0 0.0
    %2005 = vmatprep.subr.mxu0 0.0
    %2006 = vmatpush1.msra.mxu0 0.0
    %2007 = vmatprep.subr.mxu0 0.0
    %2008 = vmatpush1.msra.mxu0 0.0
    %2009 = vmatprep.subr.mxu0 0.0
    %2010 = vmatpush1.msra.mxu0 0.0
    %2011 = vmatprep.subr.mxu0 0.0
    %2012 = vmatpush1.msra.mxu0 0.0
    %2013 = vmatprep.subr.mxu0 0.0
    %2014 = vmatpush1.msra.mxu0 0.0
    %2015 = vmatprep.subr.mxu0 0.0
    %2016 = vmatpush1.msra.mxu0 0.0
    %2017 = vmatprep.subr.mxu0 0.0
    %2018 = vmatpush1.msra.mxu0 0.0
    %2019 = vmatprep.subr.mxu0 0.0
    %2020 = vmatpush1.msra.mxu0 0.0
    %2021 = vmatprep.subr.mxu0 0.0
    %2022 = vmatpush1.msra.mxu0 0.0
    %2023 = vmatprep.subr.mxu0 0.0
    %2024 = vmatpush1.msra.mxu0 0.0
    %2025 = vmatprep.subr.mxu0 0.0
    %2026 = vmatpush1.msra.mxu0 0.0
    %2027 = vmatprep.subr.mxu0 0.0
    %2028 = vmatpush1.msra.mxu0 0.0
    %2029 = vmatprep.subr.mxu0 0.0
    %2030 = vmatpush1.msra.mxu0 0.0
    %2031 = vmatprep.subr.mxu0 0.0
    %2032 = vmatpush1.msra.mxu0 0.0
    %2033 = vmatprep.subr.mxu0 0.0
    %2034 = vmatpush1.msra.mxu0 0.0
    %2035 = vmatprep.subr.mxu0 0.0
    %2036 = vmatpush1.msra.mxu0 0.0
    %2037 = vmatprep.subr.mxu0 0.0
    %2038 = vmatpush1.msra.mxu0 0.0
    %2039 = vmatprep.subr.mxu0 0.0
    %2040 = vmatpush1.msra.mxu0 0.0
    %2041 = vmatprep.subr.mxu0 0.0
    %2042 = vmatpush1.msra.mxu0 0.0
    %2043 = vmatprep.subr.mxu0 0.0
    %2044 = vmatpush1.msra.mxu0 0.0
    %2045 = vmatprep.subr.mxu0 0.0
    %2046 = vmatpush1.msra.mxu0 0.0
    %2047 = vmatprep.subr.mxu0 0.0
    %2048 = vmatpush1.msra.mxu0 0.0
    %2049 = vmatprep.subr.mxu0 0.0
    %2050 = vmatpush1.msra.mxu0 0.0
    %2051 = vmatprep.subr.mxu0 0.0
    %2052 = vmatpush1.msra.mxu0 0.0
    %2053 = vmatprep.subr.mxu0 0.0
    %2054 = vmatpush1.msra.mxu0 0.0
    %2055 = vmatprep.subr.mxu0 0.0
    %2056 = vmatpush1.msra.mxu0 0.0
    %2057 = vmatprep.subr.mxu0 0.0
    %2058 = vmatpush1.msra.mxu0 0.0
    %2059 = vmatprep.mubr.f32.mxu0 0.0
    %2060 = vmatmul.mubr.f32.gmra.mrb[0].mxu0 %v1993
    %v2061 = vpop.f32.mrb[0].mxu0
    %v2062 = vadd.f32 0.0, %v2061
    %v2063 = vpop.f32.mrb[0].mxu0
    %2064 = vdwg.mxu0
    %2065 = vst [vmem:[#allocation3 + $0x18] sm:$0xff] %v1989
    %2066 = vst [vmem:[#allocation3 + $0x38] sm:$0xff] %v2062
    %v2067 = vld [vmem:[#allocation3] sm:$0xff]
    %v2068 = vld [vmem:[#allocation3 + $0x8] sm:$0xff]
    %v2069 = vld [vmem:[#allocation3 + $0x10] sm:$0xff]
    %v2070 = vld [vmem:[#allocation3 + $0x18] sm:$0xff]
    %v2071 = vld [vmem:[#allocation3 + $0x20] sm:$0xff]
    %v2072 = vld [vmem:[#allocation3 + $0x28] sm:$0xff]
    %v2073 = vld [vmem:[#allocation3 + $0x30] sm:$0xff]
    %v2074 = vld [vmem:[#allocation3 + $0x38] sm:$0xff]
    %v2075 = vld [vmem:[#allocation10] sm:$0xff]
    %v2076 = vld [vmem:[#allocation10 + $0x8] sm:$0xff]
    %v2077 = vld [vmem:[#allocation10 + $0x10] sm:$0xff]
    %v2078 = vld [vmem:[#allocation10 + $0x18] sm:$0xff]
    %v2079 = vld [vmem:[#allocation10 + $0x20] sm:$0xff]
    %v2080 = vld [vmem:[#allocation10 + $0x28] sm:$0xff]
    %v2081 = vld [vmem:[#allocation10 + $0x30] sm:$0xff]
    %v2082 = vld [vmem:[#allocation10 + $0x38] sm:$0xff]
    %v2083 = vld [vmem:[#allocation10 + $0x40] sm:$0xff]
    %v2084 = vld [vmem:[#allocation10 + $0x48] sm:$0xff]
    %v2085 = vld [vmem:[#allocation10 + $0x50] sm:$0xff]
    %v2086 = vld [vmem:[#allocation10 + $0x58] sm:$0xff]
    %v2087 = vld [vmem:[#allocation10 + $0x60] sm:$0xff]
    %v2088 = vld [vmem:[#allocation10 + $0x68] sm:$0xff]
    %v2089 = vld [vmem:[#allocation10 + $0x70] sm:$0xff]
    %v2090 = vld [vmem:[#allocation10 + $0x78] sm:$0xff]
    %v2091 = vld [vmem:[#allocation10 + $0x80] sm:$0xff]
    %v2092 = vld [vmem:[#allocation10 + $0x88] sm:$0xff]
    %v2093 = vld [vmem:[#allocation10 + $0x90] sm:$0xff]
    %v2094 = vld [vmem:[#allocation10 + $0x98] sm:$0xff]
    %v2095 = vld [vmem:[#allocation10 + $0xa0] sm:$0xff]
    %v2096 = vld [vmem:[#allocation10 + $0xa8] sm:$0xff]
    %v2097 = vld [vmem:[#allocation10 + $0xb0] sm:$0xff]
    %v2098 = vld [vmem:[#allocation10 + $0xb8] sm:$0xff]
    %v2099 = vld [vmem:[#allocation10 + $0xc0] sm:$0xff]
    %v2100 = vld [vmem:[#allocation10 + $0xc8] sm:$0xff]
    %v2101 = vld [vmem:[#allocation10 + $0xd0] sm:$0xff]
    %v2102 = vld [vmem:[#allocation10 + $0xd8] sm:$0xff]
    %v2103 = vld [vmem:[#allocation10 + $0xe0] sm:$0xff]
    %v2104 = vld [vmem:[#allocation10 + $0xe8] sm:$0xff]
    %v2105 = vld [vmem:[#allocation10 + $0xf0] sm:$0xff]
    %v2106 = vld [vmem:[#allocation10 + $0xf8] sm:$0xff]
    %v2107 = vld [vmem:[#allocation10 + $0x100] sm:$0xff]
    %v2108 = vld [vmem:[#allocation10 + $0x108] sm:$0xff]
    %v2109 = vld [vmem:[#allocation10 + $0x110] sm:$0xff]
    %v2110 = vld [vmem:[#allocation10 + $0x118] sm:$0xff]
    %v2111 = vld [vmem:[#allocation10 + $0x120] sm:$0xff]
    %v2112 = vld [vmem:[#allocation10 + $0x128] sm:$0xff]
    %v2113 = vld [vmem:[#allocation10 + $0x130] sm:$0xff]
    %v2114 = vld [vmem:[#allocation10 + $0x138] sm:$0xff]
    %v2115 = vld [vmem:[#allocation10 + $0x140] sm:$0xff]
    %v2116 = vld [vmem:[#allocation10 + $0x148] sm:$0xff]
    %v2117 = vld [vmem:[#allocation10 + $0x150] sm:$0xff]
    %v2118 = vld [vmem:[#allocation10 + $0x158] sm:$0xff]
    %v2119 = vld [vmem:[#allocation10 + $0x160] sm:$0xff]
    %v2120 = vld [vmem:[#allocation10 + $0x168] sm:$0xff]
    %v2121 = vld [vmem:[#allocation10 + $0x170] sm:$0xff]
    %v2122 = vld [vmem:[#allocation10 + $0x178] sm:$0xff]
    %v2123 = vld [vmem:[#allocation10 + $0x180] sm:$0xff]
    %v2124 = vld [vmem:[#allocation10 + $0x188] sm:$0xff]
    %v2125 = vld [vmem:[#allocation10 + $0x190] sm:$0xff]
    %v2126 = vld [vmem:[#allocation10 + $0x198] sm:$0xff]
    %v2127 = vld [vmem:[#allocation10 + $0x1a0] sm:$0xff]
    %v2128 = vld [vmem:[#allocation10 + $0x1a8] sm:$0xff]
    %v2129 = vld [vmem:[#allocation10 + $0x1b0] sm:$0xff]
    %v2130 = vld [vmem:[#allocation10 + $0x1b8] sm:$0xff]
    %v2131 = vld [vmem:[#allocation10 + $0x1c0] sm:$0xff]
    %v2132 = vld [vmem:[#allocation10 + $0x1c8] sm:$0xff]
    %v2133 = vld [vmem:[#allocation10 + $0x1d0] sm:$0xff]
    %v2134 = vld [vmem:[#allocation10 + $0x1d8] sm:$0xff]
    %v2135 = vld [vmem:[#allocation10 + $0x1e0] sm:$0xff]
    %v2136 = vld [vmem:[#allocation10 + $0x1e8] sm:$0xff]
    %v2137 = vld [vmem:[#allocation10 + $0x1f0] sm:$0xff]
    %v2138 = vld [vmem:[#allocation10 + $0x1f8] sm:$0xff]
    %v2139 = vld [vmem:[%s6] sm:$0x1]
    %v2141 = vlaneseq
    %v2142 = vshrl.u32 %v2141, 7
    %v2143 = vsub.s32 0, %v2142
    %v2144 = vrot.slane %v2139, %v2143
    %2146 = vmatprep.subr.mxu0 0.0
    %2147 = vmatpush1.msra.mxu0 %v2075
    %2148 = vmatprep.subr.mxu0 0.0
    %2149 = vmatpush1.msra.mxu0 %v2076
    %2150 = vmatprep.subr.mxu0 0.0
    %2151 = vmatpush1.msra.mxu0 %v2077
    %2152 = vmatprep.subr.mxu0 0.0
    %2153 = vmatpush1.msra.mxu0 %v2078
    %2154 = vmatprep.subr.mxu0 0.0
    %2155 = vmatpush1.msra.mxu0 %v2079
    %2156 = vmatprep.subr.mxu0 0.0
    %2157 = vmatpush1.msra.mxu0 %v2080
    %2158 = vmatprep.subr.mxu0 0.0
    %2159 = vmatpush1.msra.mxu0 %v2081
    %2160 = vmatprep.subr.mxu0 0.0
    %2161 = vmatpush1.msra.mxu0 %v2082
    %2162 = vmatprep.subr.mxu0 0.0
    %2163 = vmatpush1.msra.mxu0 %v2083
    %2164 = vmatprep.subr.mxu0 0.0
    %2165 = vmatpush1.msra.mxu0 %v2084
    %2166 = vmatprep.subr.mxu0 0.0
    %2167 = vmatpush1.msra.mxu0 %v2085
    %2168 = vmatprep.subr.mxu0 0.0
    %2169 = vmatpush1.msra.mxu0 %v2086
    %2170 = vmatprep.subr.mxu0 0.0
    %2171 = vmatpush1.msra.mxu0 %v2087
    %2172 = vmatprep.subr.mxu0 0.0
    %2173 = vmatpush1.msra.mxu0 %v2088
    %2174 = vmatprep.subr.mxu0 0.0
    %2175 = vmatpush1.msra.mxu0 %v2089
    %2176 = vmatprep.subr.mxu0 0.0
    %2177 = vmatpush1.msra.mxu0 %v2090
    %2178 = vmatprep.subr.mxu0 0.0
    %2179 = vmatpush1.msra.mxu0 %v2091
    %2180 = vmatprep.subr.mxu0 0.0
    %2181 = vmatpush1.msra.mxu0 %v2092
    %2182 = vmatprep.subr.mxu0 0.0
    %2183 = vmatpush1.msra.mxu0 %v2093
    %2184 = vmatprep.subr.mxu0 0.0
    %2185 = vmatpush1.msra.mxu0 %v2094
    %2186 = vmatprep.subr.mxu0 0.0
    %2187 = vmatpush1.msra.mxu0 %v2095
    %2188 = vmatprep.subr.mxu0 0.0
    %2189 = vmatpush1.msra.mxu0 %v2096
    %2190 = vmatprep.subr.mxu0 0.0
    %2191 = vmatpush1.msra.mxu0 %v2097
    %2192 = vmatprep.subr.mxu0 0.0
    %2193 = vmatpush1.msra.mxu0 %v2098
    %2194 = vmatprep.subr.mxu0 0.0
    %2195 = vmatpush1.msra.mxu0 %v2099
    %2196 = vmatprep.subr.mxu0 0.0
    %2197 = vmatpush1.msra.mxu0 %v2100
    %2198 = vmatprep.subr.mxu0 0.0
    %2199 = vmatpush1.msra.mxu0 %v2101
    %2200 = vmatprep.subr.mxu0 0.0
    %2201 = vmatpush1.msra.mxu0 %v2102
    %2202 = vmatprep.subr.mxu0 0.0
    %2203 = vmatpush1.msra.mxu0 %v2103
    %2204 = vmatprep.subr.mxu0 0.0
    %2205 = vmatpush1.msra.mxu0 %v2104
    %2206 = vmatprep.subr.mxu0 0.0
    %2207 = vmatpush1.msra.mxu0 %v2105
    %2208 = vmatprep.subr.mxu0 0.0
    %2209 = vmatpush1.msra.mxu0 %v2106
    %2210 = vmatprep.mubr.f32.mxu0 %v2068
    %2211 = vmatmul.mubr.f32.gmra.mrb[0].mxu0 %v2067
    %v2212 = vpop.f32.mrb[0].mxu0
    %v2213 = vadd.f32 %v2144, %v2212
    %v2214 = vpop.f32.mrb[0].mxu0
    %2215 = vmatprep.mubr.f32.mxu0 %v2072
    %2216 = vmatmul.mubr.f32.gmra.mrb[0].mxu0 %v2071
    %v2217 = vpop.f32.mrb[0].mxu0
    %v2218 = vadd.f32 %v2144, %v2217
    %v2219 = vpop.f32.mrb[0].mxu0
    %2220 = vdwg.mxu0
    %2221 = vmatprep.subr.mxu0 0.0
    %2222 = vmatpush1.msra.mxu0 %v2107
    %2223 = vmatprep.subr.mxu0 0.0
    %2224 = vmatpush1.msra.mxu0 %v2108
    %2225 = vmatprep.subr.mxu0 0.0
    %2226 = vmatpush1.msra.mxu0 %v2109
    %2227 = vmatprep.subr.mxu0 0.0
    %2228 = vmatpush1.msra.mxu0 %v2110
    %2229 = vmatprep.subr.mxu0 0.0
    %2230 = vmatpush1.msra.mxu0 %v2111
    %2231 = vmatprep.subr.mxu0 0.0
    %2232 = vmatpush1.msra.mxu0 %v2112
    %2233 = vmatprep.subr.mxu0 0.0
    %2234 = vmatpush1.msra.mxu0 %v2113
    %2235 = vmatprep.subr.mxu0 0.0
    %2236 = vmatpush1.msra.mxu0 %v2114
    %2237 = vmatprep.subr.mxu0 0.0
    %2238 = vmatpush1.msra.mxu0 %v2115
    %2239 = vmatprep.subr.mxu0 0.0
    %2240 = vmatpush1.msra.mxu0 %v2116
    %2241 = vmatprep.subr.mxu0 0.0
    %2242 = vmatpush1.msra.mxu0 %v2117
    %2243 = vmatprep.subr.mxu0 0.0
    %2244 = vmatpush1.msra.mxu0 %v2118
    %2245 = vmatprep.subr.mxu0 0.0
    %2246 = vmatpush1.msra.mxu0 %v2119
    %2247 = vmatprep.subr.mxu0 0.0
    %2248 = vmatpush1.msra.mxu0 %v2120
    %2249 = vmatprep.subr.mxu0 0.0
    %2250 = vmatpush1.msra.mxu0 %v2121
    %2251 = vmatprep.subr.mxu0 0.0
    %2252 = vmatpush1.msra.mxu0 %v2122
    %2253 = vmatprep.subr.mxu0 0.0
    %2254 = vmatpush1.msra.mxu0 %v2123
    %2255 = vmatprep.subr.mxu0 0.0
    %2256 = vmatpush1.msra.mxu0 %v2124
    %2257 = vmatprep.subr.mxu0 0.0
    %2258 = vmatpush1.msra.mxu0 %v2125
    %2259 = vmatprep.subr.mxu0 0.0
    %2260 = vmatpush1.msra.mxu0 %v2126
    %2261 = vmatprep.subr.mxu0 0.0
    %2262 = vmatpush1.msra.mxu0 %v2127
    %2263 = vmatprep.subr.mxu0 0.0
    %2264 = vmatpush1.msra.mxu0 %v2128
    %2265 = vmatprep.subr.mxu0 0.0
    %2266 = vmatpush1.msra.mxu0 %v2129
    %2267 = vmatprep.subr.mxu0 0.0
    %2268 = vmatpush1.msra.mxu0 %v2130
    %2269 = vmatprep.subr.mxu0 0.0
    %2270 = vmatpush1.msra.mxu0 %v2131
    %2271 = vmatprep.subr.mxu0 0.0
    %2272 = vmatpush1.msra.mxu0 %v2132
    %2273 = vmatprep.subr.mxu0 0.0
    %2274 = vmatpush1.msra.mxu0 %v2133
    %2275 = vmatprep.subr.mxu0 0.0
    %2276 = vmatpush1.msra.mxu0 %v2134
    %2277 = vmatprep.subr.mxu0 0.0
    %2278 = vmatpush1.msra.mxu0 %v2135
    %2279 = vmatprep.subr.mxu0 0.0
    %2280 = vmatpush1.msra.mxu0 %v2136
    %2281 = vmatprep.subr.mxu0 0.0
    %2282 = vmatpush1.msra.mxu0 %v2137
    %2283 = vmatprep.subr.mxu0 0.0
    %2284 = vmatpush1.msra.mxu0 %v2138
    %2285 = vmatprep.mubr.f32.mxu0 %v2070
    %2286 = vmatmul.mubr.f32.gmra.mrb[0].mxu0 %v2069
    %v2287 = vpop.f32.mrb[0].mxu0
    %v2288 = vadd.f32 %v2213, %v2287
    %v2289 = vpop.f32.mrb[0].mxu0
    %2290 = vmatprep.mubr.f32.mxu0 %v2074
    %2291 = vmatmul.mubr.f32.gmra.mrb[0].mxu0 %v2073
    %v2292 = vpop.f32.mrb[0].mxu0
    %v2293 = vadd.f32 %v2218, %v2292
    %v2294 = vpop.f32.mrb[0].mxu0
    %2295 = vdwg.mxu0
    %2296 = vst [vmem:[#allocation12] sm:$0xff] %v2288
    %2297 = vst [vmem:[#allocation12 + $0x8] sm:$0xff] %v2293
    // Predicated region
    $region38: #{tpu_custom_call.1} parent=1 // pred_check
      _
    $region39: #{tpu_custom_call.1} parent=1 // pred_check_branch
      %2299 = sbr.rel (0) target = $region41
    $region40: #{tpu_custom_call.1} parent=1 // pred_region
      %s2301 = ssub.s32 256, 256
      %2302 = vsyncadd [#allocation9], %s2301
      %s2303 = sshll.u32 [#allocation12], 4
      %s2304 = int_to_ptr.vmem [resolvable:$true] %s2303
      %2309 = dma.vmem_to_hbm [thread:$0]  %s2304, 256, %s7, [#allocation9], 128, 128, 8
    $region41: #{tpu_custom_call.1} parent=1 // pred_fallthru
      _
    // Predicated region
    $region42: #{tpu_custom_call.1} parent=1 // pred_check
      _
    $region43: #{tpu_custom_call.1} parent=1 // pred_check_branch
      %2311 = sbr.rel (0) target = $region45
    $region44: #{tpu_custom_call.1} parent=1 // pred_region
      %2312 = dma.done [#allocation9], 256
    $region45: #{tpu_custom_call.1} parent=1 // pred_fallthru
      _
    %2313 = vsyncpa [#allocation8], 1
    %2314 = vsyncpa [#allocation11], 1
    %2315 = vsyncpa [#allocation9], 1
  %2316 = vsyncmov [#allocation4]
  %s2317 = vpop.sfrf %2316
  %p2318 = scmp.eq.s32.totalorder %s2317, 0
  %p2319 = pneg %p2318
  %2321 = shalt.err (%p2319)
  %s2322 = scalar_lea.sflag [#allocation4], 1
  %2323 = vsyncmov %s2322
  %s2324 = vpop.sfrf %2323
  %p2325 = scmp.eq.s32.totalorder %s2324, 0
  %p2326 = pneg %p2325
  %2328 = shalt.err (%p2326)

</llo_original>
